<compile_context>
chip_gen: v5e
topology: v5e:2x2
jax: 0.10.0
libtpu: 0.0.40
codegen_flags: <defaults>
</compile_context>

<pallas_src>
import jax
import jax.numpy as jnp
from jax import lax
from jax.experimental import pallas as pl
from jax.experimental.pallas import tpu as pltpu


def _relational_agg_kernel(h_dst_ref, h_src_ref, wt_ref, wa_ref, adj_ref,
                           gamma_ref, beta_ref, out_ref, q_ref, acc_ref, att_ref):
    s = pl.program_id(1)
    r = pl.program_id(2)
    last_s = pl.num_programs(1) - 1
    last_r = pl.num_programs(2) - 1

    # Per dst-tile prologue (runs once per i): zero the accumulators and
    # precompute q[r] = (h_dst * W_A[r]) @ W_T[r] for ALL etypes in one batched
    # bf16 MXU op with f32 accumulation (W_T stored (out, in): the elementwise
    # W_A mul indexes the 'out' axis, the matmul contracts it — no transpose).
    @pl.when((s == 0) & (r == 0))
    def _dst_prologue():
        acc_ref[...] = jnp.zeros_like(acc_ref)
        att_ref[...] = jnp.zeros_like(att_ref)
        h_dst = h_dst_ref[...]                                   # (TM, D) bf16
        wa = wa_ref[...]                                         # (R, D)  bf16
        x = h_dst[None, :, :] * wa[:, None, :]                   # (R, TM, D) bf16
        q = lax.dot_general(x, wt_ref[...],                      # (R, TM, D) f32
                            dimension_numbers=(((2,), (1,)), ((0,), (0,))),
                            preferred_element_type=jnp.float32)
        q_ref[...] = q.astype(jnp.bfloat16)

    h_src = h_src_ref[...]                                       # (TS, D) bf16

    # score[v, u] = q[r][v] . h_src[u]  (contract last dims; MXU-native, bf16
    # operands, f32 accumulate).
    # TODO(synk): verify in the Mosaic dump that this lowers without a vxpose;
    # if it does, pre-transpose the src features in HBM instead.
    score = lax.dot_general(q_ref[r], h_src,
                            dimension_numbers=(((1,), (1,)), ((), ())),
                            preferred_element_type=jnp.float32)  # (TM, TS) f32

    # int8 adjacency used directly as the mask; masking AFTER exp via a select
    # means masked entries never produce 0*inf NaNs.
    # TODO(synk): no per-row max stabilization of exp (matches the reference
    # module, which also applies a raw exp to the scores).
    e = jnp.where(adj_ref[0] != 0, jnp.exp(score), 0.0)          # (TM, TS) f32

    # Message numerator on the MXU (bf16 operands), att row-sum on the XLU.
    acc_ref[...] += jnp.dot(e.astype(jnp.bfloat16), h_src,
                            preferred_element_type=jnp.float32)  # (TM, D) f32
    att_ref[...] += jnp.sum(e, axis=-1, keepdims=True)           # (TM, 1) f32

    @pl.when((s == last_s) & (r == last_r))
    def _finalize():
        msg = acc_ref[...]                                       # (TM, D)
        att = att_ref[...]                                       # (TM, 1)
        inv_att = pl.reciprocal(att, approx=True)                # EUP slot
        # att > 0 guard (isolated dst rows): the reference would emit NaN there.
        h_new = jnp.where(att > 0.0, msg * inv_att, 0.0)
        h_new = jnp.maximum(h_new, 0.0)                          # F.relu_
        mean = jnp.mean(h_new, axis=-1, keepdims=True)
        var = jnp.mean(jnp.square(h_new - mean), axis=-1, keepdims=True)
        normed = (h_new - mean) * lax.rsqrt(var + 1e-5)
        y = normed * gamma_ref[...] + beta_ref[...]
        # TODO(synk): nn.Dropout implemented as eval-mode identity (no RNG mask).
        out_ref[...] = y.astype(out_ref.dtype)


def _pick_tile(n, cap=512, want_multi=False):
    """Largest tile <= cap dividing n (multiple of 8); with want_multi, prefer a
    dst grid of >= 2 (ideally even) tiles so v7x's two TensorCores stay busy."""
    divisors = [t for t in range(8, min(n, cap) + 1, 8) if n % t == 0]
    if not divisors:
        return n
    if want_multi:
        even = [t for t in divisors if (n // t) >= 2 and (n // t) % 2 == 0]
        multi = [t for t in divisors if (n // t) >= 2]
        if even:
            return max(even)
        if multi:
            return max(multi)
    return max(divisors)


def _vmem_limit_bytes(tile_m, tile_s, D, R):
    """Scoped-VMEM request sized from the actual buffers (not a blanket 48 MiB)."""
    bf, f32, i8 = 2, 4, 1
    dbl = 2  # Pallas double-buffers each BlockSpec'd operand
    inputs = dbl * (tile_m * D * bf            # dst feature tile (bf16)
                    + tile_s * D * bf          # src feature tile (bf16)
                    + R * D * D * bf           # resident W_T
                    + R * D * bf               # resident W_A
                    + tile_m * tile_s * i8     # int8 adjacency tile
                    + 2 * D * f32)             # gamma + beta
    outputs = dbl * tile_m * D * f32
    scratch = R * tile_m * D * bf + tile_m * D * f32 + tile_m * f32
    interm = 4 * tile_m * tile_s * f32         # score / e / mask temporaries
    est = inputs + outputs + scratch + interm
    # 2x margin for compiler-internal scratch; stay well under v7x's 64 MiB.
    return int(min(max(2 * est, 16 * 1024 * 1024), 40 * 1024 * 1024))


def relational_agg(h, wt, wa, adj, gamma, beta, *, tile_m=None, tile_s=None,
                   out_dtype=jnp.float32, vmem_limit_bytes=None):
    """h: (N, D); wt: (R, D, D) in PyTorch (out, in) layout; wa: (R, D);
    adj: (R, N, N) 0/1 (ideally already int8); gamma/beta: (1, D)."""
    N, D = h.shape
    R = wt.shape[0]
    assert wt.shape == (R, D, D) and wa.shape == (R, D) and adj.shape == (R, N, N)

    if tile_m is None:
        tile_m = _pick_tile(N, want_multi=True)
    if tile_s is None:
        tile_s = _pick_tile(N)
    assert N % tile_m == 0 and N % tile_s == 0, "N must be divisible by tiles"

    # One-time operand prep; ideally the stored formats already match so this is
    # a no-op per call (the adjacency cast alone can otherwise dominate traffic).
    if adj.dtype != jnp.int8:
        adj = adj.astype(jnp.int8)  # TODO(synk): store adjacency as int8 (or bit-packed) upstream
    h_bf = h if h.dtype == jnp.bfloat16 else h.astype(jnp.bfloat16)
    wt_bf = wt if wt.dtype == jnp.bfloat16 else wt.astype(jnp.bfloat16)
    wa_bf = wa if wa.dtype == jnp.bfloat16 else wa.astype(jnp.bfloat16)
    gamma = gamma.astype(jnp.float32).reshape(1, D)
    beta = beta.astype(jnp.float32).reshape(1, D)

    if vmem_limit_bytes is None:
        vmem_limit_bytes = _vmem_limit_bytes(tile_m, tile_s, D, R)

    grid = (N // tile_m, N // tile_s, R)   # etype innermost: src tile DMA'd once per (i, s)

    # Advisory cost estimate so XLA schedules around a heavy custom call.
    n_i = N // tile_m
    flops = (2 * R * N * D * D            # q prologue
             + 2 * R * N * N * D          # score matmul
             + 2 * R * N * N * D          # message matmul
             + R * N * N)                 # att row-sums
    transcendentals = R * N * N
    bytes_accessed = (R * N * N * 1                       # int8 adjacency stream
                      + N * D * 2                         # dst features (bf16)
                      + n_i * N * D * 2                   # src features (bf16, once per (i, s))
                      + R * D * (D + 1) * 2               # resident weights
                      + N * D * 4 + 2 * D * 4)            # output + gamma/beta

    return pl.pallas_call(
        _relational_agg_kernel,
        out_shape=jax.ShapeDtypeStruct((N, D), out_dtype),
        grid_spec=pltpu.PrefetchScalarGridSpec(
            num_scalar_prefetch=0,
            grid=grid,
            in_specs=[
                pl.BlockSpec((tile_m, D), lambda i, s, r: (i, 0)),        # h (dst tile)
                pl.BlockSpec((tile_s, D), lambda i, s, r: (s, 0)),        # h (src tile)
                pl.BlockSpec((R, D, D), lambda i, s, r: (0, 0, 0)),       # W_T (resident)
                pl.BlockSpec((R, D), lambda i, s, r: (0, 0)),             # W_A (resident)
                pl.BlockSpec((1, tile_m, tile_s), lambda i, s, r: (r, i, s)),  # adj tile (int8)
                pl.BlockSpec((1, D), lambda i, s, r: (0, 0)),             # layernorm gamma
                pl.BlockSpec((1, D), lambda i, s, r: (0, 0)),             # layernorm beta
            ],
            out_specs=pl.BlockSpec((tile_m, D), lambda i, s, r: (i, 0)),
            scratch_shapes=[
                pltpu.VMEM((R, tile_m, D), jnp.bfloat16),  # q[r] per dst tile (all etypes)
                pltpu.VMEM((tile_m, D), jnp.float32),      # message accumulator
                pltpu.VMEM((tile_m, 1), jnp.float32),      # att accumulator
            ],
        ),
        compiler_params=pltpu.CompilerParams(
            # dst tiles independent (megacore on v7x); (src, etype) are reductions.
            dimension_semantics=("parallel", "arbitrary", "arbitrary"),
            vmem_limit_bytes=vmem_limit_bytes,
        ),
        cost_estimate=pl.CostEstimate(flops=int(flops),
                                      transcendentals=int(transcendentals),
                                      bytes_accessed=int(bytes_accessed)),
    )(h_bf, h_bf, wt_bf, wa_bf, adj, gamma, beta)


def _reference(h, wt, wa, adj, gamma, beta):
    """Pure-JAX reference with the original (un-restructured) math."""
    N, D = h.shape
    att = jnp.zeros((N, 1), jnp.float32)
    msg = jnp.zeros((N, D), jnp.float32)
    for r in range(wt.shape[0]):
        t_h = h @ wt[r].T
        score = (h * wa[r][None, :]) @ t_h.T
        e = adj[r].astype(jnp.float32) * jnp.exp(score)
        att = att + e.sum(axis=1, keepdims=True)
        msg = msg + e @ h
    h_new = jnp.maximum(msg / att, 0.0)
    mean = h_new.mean(axis=-1, keepdims=True)
    var = ((h_new - mean) ** 2).mean(axis=-1, keepdims=True)
    return (h_new - mean) / jnp.sqrt(var + 1e-5) * gamma + beta


if __name__ == "__main__":
    # Small but tiling-exercising sizes: grid = (2 dst tiles, 2 src tiles, 3 etypes).
    N, D, R = 256, 128, 3            # nodes, in_size == out_size, edge types
    TM, TS = 128, 128
    key = jax.random.PRNGKey(0)
    k_h, k_wt, k_wa, k_adj, k_g, k_b = jax.random.split(key, 6)

    h = 0.2 * jax.random.normal(k_h, (N, D), jnp.float32)          # feat_dict
    wt = 0.2 * jax.random.normal(k_wt, (R, D, D), jnp.float32)     # W_T per etype (out, in)
    wa = 0.2 * jax.random.normal(k_wa, (R, D), jnp.float32)        # W_A per etype
    adj = (jax.random.uniform(k_adj, (R, N, N)) < 0.1).astype(jnp.int8)
    # guarantee every dst node has at least one incoming edge (avoid att == 0)
    adj = adj.at[0].set(jnp.maximum(adj[0], jnp.eye(N, dtype=jnp.int8)))
    gamma = 1.0 + 0.1 * jax.random.normal(k_g, (1, D), jnp.float32)  # LayerNorm weight
    beta = 0.1 * jax.random.normal(k_b, (1, D), jnp.float32)         # LayerNorm bias

    out = jax.block_until_ready(
        relational_agg(h, wt, wa, adj, gamma, beta, tile_m=TM, tile_s=TS))
    assert out.shape == (N, D)

    # Reference uses the same bf16-rounded features/weights the kernel feeds the
    # MXU (f32 accumulation inside the kernel), so only bf16 operand rounding of
    # q and e differ — hence the slightly relaxed tolerance.
    h32 = h.astype(jnp.bfloat16).astype(jnp.float32)
    wt32 = wt.astype(jnp.bfloat16).astype(jnp.float32)
    wa32 = wa.astype(jnp.bfloat16).astype(jnp.float32)
    ref = _reference(h32, wt32, wa32, adj, gamma, beta)

    max_err = float(jnp.max(jnp.abs(out - ref)))
    assert jnp.allclose(out, ref, atol=2e-2, rtol=2e-2), \
        f"kernel/reference mismatch, max abs err {max_err}"
    print("KERNEL_OK")
</pallas_src>

<mosaic_0001>
module attributes {stable_mosaic.version = 11 : i64} {
  func.func @_relational_agg_kernel(%arg0: i32, %arg1: i32, %arg2: i32, %arg3: memref<128x128xbf16, #tpu.memory_space<vmem>>, %arg4: memref<128x128xbf16, #tpu.memory_space<vmem>>, %arg5: memref<3x128x128xbf16, #tpu.memory_space<vmem>>, %arg6: memref<3x128xbf16, #tpu.memory_space<vmem>>, %arg7: memref<1x128x128xi8, #tpu.memory_space<vmem>>, %arg8: memref<1x128xf32, #tpu.memory_space<vmem>>, %arg9: memref<1x128xf32, #tpu.memory_space<vmem>>, %arg10: memref<128x128xf32, #tpu.memory_space<vmem>>, %arg11: memref<3x128x128xbf16, #tpu.memory_space<vmem>>, %arg12: memref<128x128xf32, #tpu.memory_space<vmem>>, %arg13: memref<128x1xf32, #tpu.memory_space<vmem>>) attributes {dimension_semantics = [#tpu.dimension_semantics<parallel>, #tpu.dimension_semantics<arbitrary>, #tpu.dimension_semantics<arbitrary>], iteration_bounds = array<i64: 2, 2, 3>, scalar_prefetch = 0 : i64, scratch_operands = 3 : i64, tpu.core_type = #tpu.core_type<tc>, window_params = [{transform_indices = @transform_0, window_bounds = array<i64: 128, 128>}, {transform_indices = @transform_1, window_bounds = array<i64: 128, 128>}, {pipeline_mode = #tpu.pipeline_mode<synchronous>, transform_indices = @transform_2, window_bounds = array<i64: 3, 128, 128>}, {pipeline_mode = #tpu.pipeline_mode<synchronous>, transform_indices = @transform_3, window_bounds = array<i64: 3, 128>}, {transform_indices = @transform_4, window_bounds = array<i64: 1, 128, 128>}, {pipeline_mode = #tpu.pipeline_mode<synchronous>, transform_indices = @transform_5, window_bounds = array<i64: 1, 128>}, {pipeline_mode = #tpu.pipeline_mode<synchronous>, transform_indices = @transform_6, window_bounds = array<i64: 1, 128>}, {transform_indices = @transform_7, window_bounds = array<i64: 128, 128>}]} {
    %c0_i32 = arith.constant 0 : i32
    %0 = arith.cmpi eq, %arg1, %c0_i32 : i32
    %c0_i32_0 = arith.constant 0 : i32
    %1 = arith.cmpi eq, %arg2, %c0_i32_0 : i32
    %2 = arith.andi %0, %1 : i1
    %3 = arith.extui %2 : i1 to i32
    %c0_i32_1 = arith.constant 0 : i32
    %4 = arith.cmpi ne, %3, %c0_i32_1 : i32
    scf.if %4 {
      %cst_20 = arith.constant 0.000000e+00 : f32
      %32 = vector.broadcast %cst_20 : f32 to vector<128x128xf32>
      %c0_21 = arith.constant 0 : index
      %c0_22 = arith.constant 0 : index
      %33 = vector.load %arg12[%c0_21, %c0_22] : memref<128x128xf32, #tpu.memory_space<vmem>>, vector<128x128xf32>
      tpu.vector_store %arg12[%c0_21, %c0_22], %32 {strides = array<i32>} : memref<128x128xf32, #tpu.memory_space<vmem>>, vector<128x128xf32>,
      %cst_23 = arith.constant 0.000000e+00 : f32
      %34 = vector.broadcast %cst_23 : f32 to vector<128x1xf32>
      %c0_24 = arith.constant 0 : index
      %c0_25 = arith.constant 0 : index
      %35 = vector.load %arg13[%c0_24, %c0_25] : memref<128x1xf32, #tpu.memory_space<vmem>>, vector<128x1xf32>
      tpu.vector_store %arg13[%c0_24, %c0_25], %34 {strides = array<i32>} : memref<128x1xf32, #tpu.memory_space<vmem>>, vector<128x1xf32>,
      %c0_26 = arith.constant 0 : index
      %c0_27 = arith.constant 0 : index
      %36 = vector.load %arg3[%c0_26, %c0_27] : memref<128x128xbf16, #tpu.memory_space<vmem>>, vector<128x128xbf16>
      %c0_28 = arith.constant 0 : index
      %c0_29 = arith.constant 0 : index
      %37 = vector.load %arg6[%c0_28, %c0_29] : memref<3x128xbf16, #tpu.memory_space<vmem>>, vector<3x128xbf16>
      %38 = vector.shape_cast %36 : vector<128x128xbf16> to vector<1x128x128xbf16>
      %39 = vector.shape_cast %37 : vector<3x128xbf16> to vector<3x1x128xbf16>
      %40 = vector.broadcast %38 : vector<1x128x128xbf16> to vector<3x128x128xbf16>
      %41 = vector.broadcast %39 : vector<3x1x128xbf16> to vector<3x128x128xbf16>
      %42 = arith.mulf %40, %41 : vector<3x128x128xbf16>
      %c0_30 = arith.constant 0 : index
      %c0_31 = arith.constant 0 : index
      %c0_32 = arith.constant 0 : index
      %43 = vector.load %arg5[%c0_30, %c0_31, %c0_32] : memref<3x128x128xbf16, #tpu.memory_space<vmem>>, vector<3x128x128xbf16>
      %cst_33 = arith.constant dense<0.000000e+00> : vector<3x128x128xf32>
      %44 = tpu.matmul %42, %43, %cst_33 {dimension_numbers = #tpu.dot_dimension_numbers<[2], [1], [1], [2], [0, 0, 0, 1, 1, 2], [0], [0]>} : vector<3x128x128xbf16>, vector<3x128x128xbf16>, vector<3x128x128xf32> -> vector<3x128x128xf32>
      %45 = arith.truncf %44 : vector<3x128x128xf32> to vector<3x128x128xbf16>
      %c0_34 = arith.constant 0 : index
      %c0_35 = arith.constant 0 : index
      %c0_36 = arith.constant 0 : index
      %46 = vector.load %arg11[%c0_34, %c0_35, %c0_36] : memref<3x128x128xbf16, #tpu.memory_space<vmem>>, vector<3x128x128xbf16>
      tpu.vector_store %arg11[%c0_34, %c0_35, %c0_36], %45 {strides = array<i32>} : memref<3x128x128xbf16, #tpu.memory_space<vmem>>, vector<3x128x128xbf16>,
    } else {
    }
    %c0 = arith.constant 0 : index
    %c0_2 = arith.constant 0 : index
    %5 = vector.load %arg4[%c0, %c0_2] : memref<128x128xbf16, #tpu.memory_space<vmem>>, vector<128x128xbf16>
    %6 = arith.index_cast %arg2 : i32 to index
    %c0_3 = arith.constant 0 : index
    %c0_4 = arith.constant 0 : index
    %7 = vector.load %arg11[%6, %c0_3, %c0_4] : memref<3x128x128xbf16, #tpu.memory_space<vmem>>, vector<1x128x128xbf16>
    %8 = vector.shape_cast %7 : vector<1x128x128xbf16> to vector<128x128xbf16>
    %cst = arith.constant dense<0.000000e+00> : vector<128x128xf32>
    %9 = tpu.matmul %8, %5, %cst {dimension_numbers = #tpu.dot_dimension_numbers<[1], [1], [0], [0], [0, 0, 1, 0], [], []>} : vector<128x128xbf16>, vector<128x128xbf16>, vector<128x128xf32> -> vector<128x128xf32>
    %c0_5 = arith.constant 0 : index
    %c0_6 = arith.constant 0 : index
    %c0_7 = arith.constant 0 : index
    %10 = vector.load %arg7[%c0_5, %c0_6, %c0_7] : memref<1x128x128xi8, #tpu.memory_space<vmem>>, vector<1x128x128xi8>
    %11 = vector.shape_cast %10 : vector<1x128x128xi8> to vector<128x128xi8>
    %c0_i8 = arith.constant 0 : i8
    %12 = vector.broadcast %c0_i8 : i8 to vector<128x128xi8>
    %13 = arith.cmpi ne, %11, %12 : vector<128x128xi8>
    %14 = math.exp %9 : vector<128x128xf32>
    %cst_8 = arith.constant 0.000000e+00 : f32
    %15 = vector.broadcast %cst_8 : f32 to vector<128x128xf32>
    %16 = arith.select %13, %14, %15 : vector<128x128xi1>, vector<128x128xf32>
    %c0_9 = arith.constant 0 : index
    %c0_10 = arith.constant 0 : index
    %17 = vector.load %arg12[%c0_9, %c0_10] : memref<128x128xf32, #tpu.memory_space<vmem>>, vector<128x128xf32>
    %18 = arith.truncf %16 : vector<128x128xf32> to vector<128x128xbf16>
    %cst_11 = arith.constant dense<0.000000e+00> : vector<128x128xf32>
    %19 = tpu.matmul %18, %5, %cst_11 {dimension_numbers = #tpu.dot_dimension_numbers<[1], [0], [0], [1], [0, 0, 1, 1], [], []>} : vector<128x128xbf16>, vector<128x128xbf16>, vector<128x128xf32> -> vector<128x128xf32>
    %20 = arith.addf %17, %19 : vector<128x128xf32>
    %c0_12 = arith.constant 0 : index
    %c0_13 = arith.constant 0 : index
    %21 = vector.load %arg12[%c0_12, %c0_13] : memref<128x128xf32, #tpu.memory_space<vmem>>, vector<128x128xf32>
    tpu.vector_store %arg12[%c0_12, %c0_13], %20 {strides = array<i32>} : memref<128x128xf32, #tpu.memory_space<vmem>>, vector<128x128xf32>,
    %c0_14 = arith.constant 0 : index
    %c0_15 = arith.constant 0 : index
    %22 = vector.load %arg13[%c0_14, %c0_15] : memref<128x1xf32, #tpu.memory_space<vmem>>, vector<128x1xf32>
    %cst_16 = arith.constant dense<0.000000e+00> : vector<128xf32>
    %23 = vector.multi_reduction <add>, %16, %cst_16 [1] : vector<128x128xf32> to vector<128xf32>
    %24 = vector.shape_cast %23 : vector<128xf32> to vector<128x1xf32>
    %25 = arith.addf %22, %24 : vector<128x1xf32>
    %c0_17 = arith.constant 0 : index
    %c0_18 = arith.constant 0 : index
    %26 = vector.load %arg13[%c0_17, %c0_18] : memref<128x1xf32, #tpu.memory_space<vmem>>, vector<128x1xf32>
    tpu.vector_store %arg13[%c0_17, %c0_18], %25 {strides = array<i32>} : memref<128x1xf32, #tpu.memory_space<vmem>>, vector<128x1xf32>,
    %c1_i32 = arith.constant 1 : i32
    %27 = arith.cmpi eq, %arg1, %c1_i32 : i32
    %c2_i32 = arith.constant 2 : i32
    %28 = arith.cmpi eq, %arg2, %c2_i32 : i32
    %29 = arith.andi %27, %28 : i1
    %30 = arith.extui %29 : i1 to i32
    %c0_i32_19 = arith.constant 0 : i32
    %31 = arith.cmpi ne, %30, %c0_i32_19 : i32
    scf.if %31 {
      %c0_20 = arith.constant 0 : index
      %c0_21 = arith.constant 0 : index
      %32 = vector.load %arg12[%c0_20, %c0_21] : memref<128x128xf32, #tpu.memory_space<vmem>>, vector<128x128xf32>
      %c0_22 = arith.constant 0 : index
      %c0_23 = arith.constant 0 : index
      %33 = vector.load %arg13[%c0_22, %c0_23] : memref<128x1xf32, #tpu.memory_space<vmem>>, vector<128x1xf32>
      %34 = tpu.reciprocal %33 {approx = true} : vector<128x1xf32> -> vector<128x1xf32>
      %cst_24 = arith.constant 0.000000e+00 : f32
      %35 = vector.broadcast %cst_24 : f32 to vector<128x1xf32>
      %36 = arith.cmpf ogt, %33, %35 : vector<128x1xf32>
      %37 = vector.broadcast %34 : vector<128x1xf32> to vector<128x128xf32>
      %38 = arith.mulf %32, %37 : vector<128x128xf32>
      %cst_25 = arith.constant 0.000000e+00 : f32
      %39 = vector.shape_cast %36 : vector<128x1xi1> to vector<128x1xi1>
      %40 = vector.broadcast %39 : vector<128x1xi1> to vector<128x128xi1>
      %41 = vector.broadcast %cst_25 : f32 to vector<128x128xf32>
      %42 = arith.select %40, %38, %41 : vector<128x128xi1>, vector<128x128xf32>
      %cst_26 = arith.constant 0.000000e+00 : f32
      %43 = vector.broadcast %cst_26 : f32 to vector<128x128xf32>
      %44 = arith.maximumf %42, %43 : vector<128x128xf32>
      %cst_27 = arith.constant dense<0.000000e+00> : vector<128xf32>
      %45 = vector.multi_reduction <add>, %44, %cst_27 [1] : vector<128x128xf32> to vector<128xf32>
      %46 = vector.shape_cast %45 : vector<128xf32> to vector<128x1xf32>
      %cst_28 = arith.constant 1.280000e+02 : f32
      %47 = vector.broadcast %cst_28 : f32 to vector<128x1xf32>
      %48 = arith.divf %46, %47 : vector<128x1xf32>
      %49 = vector.broadcast %48 : vector<128x1xf32> to vector<128x128xf32>
      %50 = arith.subf %44, %49 : vector<128x128xf32>
      %51 = arith.mulf %50, %50 : vector<128x128xf32>
      %cst_29 = arith.constant dense<0.000000e+00> : vector<128xf32>
      %52 = vector.multi_reduction <add>, %51, %cst_29 [1] : vector<128x128xf32> to vector<128xf32>
      %53 = vector.shape_cast %52 : vector<128xf32> to vector<128x1xf32>
      %cst_30 = arith.constant 1.280000e+02 : f32
      %54 = vector.broadcast %cst_30 : f32 to vector<128x1xf32>
      %55 = arith.divf %53, %54 : vector<128x1xf32>
      %56 = vector.broadcast %48 : vector<128x1xf32> to vector<128x128xf32>
      %57 = arith.subf %44, %56 : vector<128x128xf32>
      %cst_31 = arith.constant 9.99999974E-6 : f32
      %58 = vector.broadcast %cst_31 : f32 to vector<128x1xf32>
      %59 = arith.addf %55, %58 : vector<128x1xf32>
      %60 = math.rsqrt %59 : vector<128x1xf32>
      %61 = vector.broadcast %60 : vector<128x1xf32> to vector<128x128xf32>
      %62 = arith.mulf %57, %61 : vector<128x128xf32>
      %c0_32 = arith.constant 0 : index
      %c0_33 = arith.constant 0 : index
      %63 = vector.load %arg8[%c0_32, %c0_33] : memref<1x128xf32, #tpu.memory_space<vmem>>, vector<1x128xf32>
      %64 = vector.broadcast %63 : vector<1x128xf32> to vector<128x128xf32>
      %65 = arith.mulf %62, %64 : vector<128x128xf32>
      %c0_34 = arith.constant 0 : index
      %c0_35 = arith.constant 0 : index
      %66 = vector.load %arg9[%c0_34, %c0_35] : memref<1x128xf32, #tpu.memory_space<vmem>>, vector<1x128xf32>
      %67 = vector.broadcast %66 : vector<1x128xf32> to vector<128x128xf32>
      %68 = arith.addf %65, %67 : vector<128x128xf32>
      %c0_36 = arith.constant 0 : index
      %c0_37 = arith.constant 0 : index
      %69 = vector.load %arg10[%c0_36, %c0_37] : memref<128x128xf32, #tpu.memory_space<vmem>>, vector<128x128xf32>
      tpu.vector_store %arg10[%c0_36, %c0_37], %68 {strides = array<i32>} : memref<128x128xf32, #tpu.memory_space<vmem>>, vector<128x128xf32>,
    } else {
    }
    return
  }
  func.func @transform_0(%arg0: i32, %arg1: i32, %arg2: i32) -> (i32, i32) {
    %c0_i32 = arith.constant 0 : i32
    %c0_i32_0 = arith.constant 0 : i32
    return %arg0, %c0_i32 : i32, i32
  }
  func.func @transform_1(%arg0: i32, %arg1: i32, %arg2: i32) -> (i32, i32) {
    %c0_i32 = arith.constant 0 : i32
    %c0_i32_0 = arith.constant 0 : i32
    return %arg1, %c0_i32 : i32, i32
  }
  func.func @transform_2(%arg0: i32, %arg1: i32, %arg2: i32) -> (i32, i32, i32) {
    %c0_i32 = arith.constant 0 : i32
    %c0_i32_0 = arith.constant 0 : i32
    %c0_i32_1 = arith.constant 0 : i32
    %c0_i32_2 = arith.constant 0 : i32
    return %c0_i32, %c0_i32_0, %c0_i32_1 : i32, i32, i32
  }
  func.func @transform_3(%arg0: i32, %arg1: i32, %arg2: i32) -> (i32, i32) {
    %c0_i32 = arith.constant 0 : i32
    %c0_i32_0 = arith.constant 0 : i32
    %c0_i32_1 = arith.constant 0 : i32
    return %c0_i32, %c0_i32_0 : i32, i32
  }
  func.func @transform_4(%arg0: i32, %arg1: i32, %arg2: i32) -> (i32, i32, i32) {
    %c0_i32 = arith.constant 0 : i32
    return %arg2, %arg0, %arg1 : i32, i32, i32
  }
  func.func @transform_5(%arg0: i32, %arg1: i32, %arg2: i32) -> (i32, i32) {
    %c0_i32 = arith.constant 0 : i32
    %c0_i32_0 = arith.constant 0 : i32
    %c0_i32_1 = arith.constant 0 : i32
    return %c0_i32, %c0_i32_0 : i32, i32
  }
  func.func @transform_6(%arg0: i32, %arg1: i32, %arg2: i32) -> (i32, i32) {
    %c0_i32 = arith.constant 0 : i32
    %c0_i32_0 = arith.constant 0 : i32
    %c0_i32_1 = arith.constant 0 : i32
    return %c0_i32, %c0_i32_0 : i32, i32
  }
  func.func @transform_7(%arg0: i32, %arg1: i32, %arg2: i32) -> (i32, i32) {
    %c0_i32 = arith.constant 0 : i32
    %c0_i32_0 = arith.constant 0 : i32
    return %arg0, %c0_i32 : i32, i32
  }
}

</mosaic_0001>

<llo_original>
// kernel: tpu_custom_call.1
$region0: #{tpu_custom_call.1}
  #allocation0 [shape = 'u32[]', space=smem, size = 0x4, offset = 0x4, fixed_abs, tag = 'smem constant byte address 0x4 - core index']
  #allocation1 [shape = 'u32[72,128]{1,0:T(1,128)}', space=vmem, size = 0x9000, scoped, tag = 'internal scratch']
  #allocation2 [shape = 'bf16[3,128,128]{2,1,0:T(8,128)(2,1)}', space=vmem, size = 0x18000, scoped, tag = 'scratch operand']
  #allocation3 [shape = 'f32[128,128]{1,0:T(8,128)}', space=vmem, size = 0x10000, scoped, tag = 'scratch operand']
  #allocation4 [shape = 'f32[128,1]{1,0:T(8,128)}', space=vmem, size = 0x10000, scoped, tag = 'scratch operand']
  %s0 = inlined_call_operand.hbm [shape: bf16[256,128], index: 0, kind: input, shape index: {}]
  %s1 = inlined_call_operand.hbm [shape: bf16[256,128], index: 1, kind: input, shape index: {}]
  %s2 = inlined_call_operand.hbm [shape: bf16[3,128,128], index: 2, kind: input, shape index: {}]
  %s3 = inlined_call_operand.vmem [shape: bf16[3,128], index: 3, kind: input, shape index: {}]
  %s4 = inlined_call_operand.hbm [shape: s8[3,256,256], index: 4, kind: input, shape index: {}]
  %s5 = inlined_call_operand.vmem [shape: f32[1,128], index: 5, kind: input, shape index: {}]
  %s6 = inlined_call_operand.vmem [shape: f32[1,128], index: 6, kind: input, shape index: {}]
  %s7 = inlined_call_operand.hbm [shape: f32[256,128], index: 7, kind: output, shape index: {}]
  %s8 = sld [smem:[#allocation0]]
  $region85: #{tpu_custom_call.1} parent=0
    _
  %s10 = ssub.s32 1, %s8
  %s11 = scalar_select 0, %s10, %s8
  $region1: #{tpu_custom_call.1} parent=0
    #allocation5 [shape = 'u8[65536]{0}', space=vmem, size = 0x10000, scoped, tag = 'input window, operand 0']
    #allocation6 [shape = 's32[2]{0}', space=sflag, size = 0x8, scoped, tag = 'scoped memory for tpu_custom_call.1']
    #allocation7 [shape = 's32[2]{0}', space=sflag, size = 0x8, scoped, tag = 'scoped memory for tpu_custom_call.1']
    #allocation8 [shape = 'u8[65536]{0}', space=vmem, size = 0x10000, scoped, tag = 'input window, operand 1']
    #allocation9 [shape = 's32[2]{0}', space=sflag, size = 0x8, scoped, tag = 'scoped memory for tpu_custom_call.1']
    #allocation10 [shape = 'u8[98304]{0}', space=vmem, size = 0x18000, scoped, tag = 'input window, operand 2, single buffered']
    #allocation11 [shape = 'u8[32768]{0}', space=vmem, size = 0x8000, scoped, tag = 'input window, operand 4']
    #allocation12 [shape = 's32[2]{0}', space=sflag, size = 0x8, scoped, tag = 'scoped memory for tpu_custom_call.1']
    #allocation13 [shape = 'u8[131072]{0}', space=vmem, size = 0x20000, scoped, tag = 'output window, operand 0']
    %12 = vsyncpa [#allocation6], 0
    %s13 = scalar_lea.sflag [#allocation6], 1
    %14 = vsyncpa %s13, 0
    %15 = vsyncpa [#allocation9], 0
    %s16 = scalar_lea.sflag [#allocation9], 1
    %17 = vsyncpa %s16, 0
    %18 = vsyncpa [#allocation12], 0
    %s19 = scalar_lea.sflag [#allocation12], 1
    %20 = vsyncpa %s19, 0
    %21 = vsyncpa [#allocation7], 0
    %s22 = scalar_lea.sflag [#allocation7], 1
    %23 = vsyncpa %s22, 0
    loop: start=0, step=1, limit=14
    $region2: #{tpu_custom_call.1} parent=1 // loop_pre_header
      _
    $region3: #{tpu_custom_call.1} parent=1 // loop_header
      %s25 = sphi 0, %s29
      %p26 = scmp.ge.s32.totalorder %s25, 14
      %s32 = sphi 0, %s51
      %s33 = sphi 0, %s47
      %s34 = sphi 0, %s43
      %s35 = sphi 0, %s32
      %s36 = sphi 0, %s33
      %s37 = sphi 0, %s34
      %s38 = sphi 0, %s35
      %s39 = sphi 0, %s36
      %s40 = sphi 0, %s37
      %s54 = sphi 0, %s56
      %s57 = sphi 0, %s54
      %s58 = sphi 0, %s57
      %s74 = sphi 0, %s58
      %s80 = sphi 0, %s82
      %s83 = sphi 0, %s80
      %s84 = sphi 0, %s83
      %s100 = sphi 0, %s84
      %s104 = sphi 0, %s104
      %s106 = sphi 0, %s104
      %s107 = sphi 0, %s106
      %s121 = sphi 0, %s107
      %s125 = sphi 0, %s125
      %s127 = sphi 0, %s125
      %s128 = sphi 0, %s127
      %s142 = sphi 0, %s128
      %s152 = sphi 0, %s154
      %s155 = sphi 0, %s152
      %s156 = sphi 0, %s155
      %s172 = sphi 0, %s156
      %s176 = sphi 0, %s176
      %s178 = sphi 0, %s176
      %s179 = sphi 0, %s178
      %s193 = sphi 0, %s179
      %s197 = sphi 0, %s197
      %s199 = sphi 0, %s197
      %s200 = sphi 0, %s199
      %s214 = sphi 0, %s200
      %s220 = sphi 0, %s222
      %s223 = sphi 0, %s220
      %s224 = sphi 0, %s223
      %s240 = sphi 0, %s224
    $region4: #{tpu_custom_call.1} parent=1 // loop_header_branch
      %28 = sbr.rel (%p26) target = $region8
    $region5: #{tpu_custom_call.1} parent=1 // loop_body
      %s30 = ssub.s32 %s25, 1
      %s31 = ssub.s32 %s25, 2
      %s41 = sadd.s32 1, %s34
      %p42 = scmp.ge.s32.totalorder %s41, 3
      %s43 = scalar_select %p42, 0, %s41
      %s44 = sadd.s32 1, %s33
      %s45 = scalar_select %p42, %s44, %s33
      %p46 = scmp.ge.s32.totalorder %s45, 2
      %s47 = scalar_select %p46, 0, %s45
      %s48 = sadd.s32 1, %s32
      %s49 = scalar_select %p46, %s48, %s32
      %p50 = scmp.ge.s32.totalorder %s49, 2
      %s51 = scalar_select %p50, 0, %s49
      %s52 = ssub.s32 %s32, %s51
      %p53 = scmp.eq.s32.totalorder %s52, 0
      %s55 = sadd.s32 %s54, 1
      %s56 = scalar_select %p53, %s54, %s55
      %p59 = pneg %p53
      %p60 = scmp.eq.s32.totalorder %s25, 11
      %p61 = por %p59, %p60
      %p62 = scmp.ne.s32.totalorder %s54, %s57
      %p63 = scmp.eq.s32.totalorder %s25, 0
      %p64 = por %p62, %p63
      %p65 = scmp.ne.s32.totalorder %s54, %s57
      %p66 = scmp.eq.s32.totalorder %s30, 11
      %p67 = por %p65, %p66
      %p68 = scmp.ne.s32.totalorder %s57, %s58
      %p69 = scmp.eq.s32.totalorder %s30, 0
      %p70 = por %p68, %p69
      %p71 = scmp.ne.s32.totalorder %s57, %s58
      %p72 = scmp.eq.s32.totalorder %s31, 11
      %p73 = por %p71, %p72
      %p75 = scmp.ne.s32.totalorder %s58, %s74
      %p76 = scmp.eq.s32.totalorder %s31, 0
      %p77 = por %p75, %p76
      %s78 = ssub.s32 %s33, %s47
      %p79 = scmp.eq.s32.totalorder %s78, 0
      %s81 = sadd.s32 %s80, 1
      %s82 = scalar_select %p79, %s80, %s81
      %p85 = pneg %p79
      %p86 = scmp.eq.s32.totalorder %s25, 11
      %p87 = por %p85, %p86
      %p88 = scmp.ne.s32.totalorder %s80, %s83
      %p89 = scmp.eq.s32.totalorder %s25, 0
      %p90 = por %p88, %p89
      %p91 = scmp.ne.s32.totalorder %s80, %s83
      %p92 = scmp.eq.s32.totalorder %s30, 11
      %p93 = por %p91, %p92
      %p94 = scmp.ne.s32.totalorder %s83, %s84
      %p95 = scmp.eq.s32.totalorder %s30, 0
      %p96 = por %p94, %p95
      %p97 = scmp.ne.s32.totalorder %s83, %s84
      %p98 = scmp.eq.s32.totalorder %s31, 11
      %p99 = por %p97, %p98
      %p101 = scmp.ne.s32.totalorder %s84, %s100
      %p102 = scmp.eq.s32.totalorder %s31, 0
      %p103 = por %p101, %p102
      %s105 = sadd.s32 %s104, 1
      %p108 = scmp.eq.s32.totalorder %s25, 11
      %p109 = scmp.ne.s32.totalorder %s104, %s106
      %p110 = scmp.eq.s32.totalorder %s25, 0
      %p111 = por %p109, %p110
      %p112 = scmp.ne.s32.totalorder %s104, %s106
      %p113 = scmp.eq.s32.totalorder %s30, 11
      %p114 = por %p112, %p113
      %p115 = scmp.ne.s32.totalorder %s106, %s107
      %p116 = scmp.eq.s32.totalorder %s30, 0
      %p117 = por %p115, %p116
      %p118 = scmp.ne.s32.totalorder %s106, %s107
      %p119 = scmp.eq.s32.totalorder %s31, 11
      %p120 = por %p118, %p119
      %p122 = scmp.ne.s32.totalorder %s107, %s121
      %p123 = scmp.eq.s32.totalorder %s31, 0
      %p124 = por %p122, %p123
      %s126 = sadd.s32 %s125, 1
      %p129 = scmp.eq.s32.totalorder %s25, 11
      %p130 = scmp.ne.s32.totalorder %s125, %s127
      %p131 = scmp.eq.s32.totalorder %s25, 0
      %p132 = por %p130, %p131
      %p133 = scmp.ne.s32.totalorder %s125, %s127
      %p134 = scmp.eq.s32.totalorder %s30, 11
      %p135 = por %p133, %p134
      %p136 = scmp.ne.s32.totalorder %s127, %s128
      %p137 = scmp.eq.s32.totalorder %s30, 0
      %p138 = por %p136, %p137
      %p139 = scmp.ne.s32.totalorder %s127, %s128
      %p140 = scmp.eq.s32.totalorder %s31, 11
      %p141 = por %p139, %p140
      %p143 = scmp.ne.s32.totalorder %s128, %s142
      %p144 = scmp.eq.s32.totalorder %s31, 0
      %p145 = por %p143, %p144
      %s146 = ssub.s32 %s34, %s43
      %s147 = ssub.s32 %s32, %s51
      %s148 = sor.u32 %s146, %s147
      %s149 = ssub.s32 %s33, %s47
      %s150 = sor.u32 %s148, %s149
      %p151 = scmp.eq.s32.totalorder %s150, 0
      %s153 = sadd.s32 %s152, 1
      %s154 = scalar_select %p151, %s152, %s153
      %p157 = pneg %p151
      %p158 = scmp.eq.s32.totalorder %s25, 11
      %p159 = por %p157, %p158
      %p160 = scmp.ne.s32.totalorder %s152, %s155
      %p161 = scmp.eq.s32.totalorder %s25, 0
      %p162 = por %p160, %p161
      %p163 = scmp.ne.s32.totalorder %s152, %s155
      %p164 = scmp.eq.s32.totalorder %s30, 11
      %p165 = por %p163, %p164
      %p166 = scmp.ne.s32.totalorder %s155, %s156
      %p167 = scmp.eq.s32.totalorder %s30, 0
      %p168 = por %p166, %p167
      %p169 = scmp.ne.s32.totalorder %s155, %s156
      %p170 = scmp.eq.s32.totalorder %s31, 11
      %p171 = por %p169, %p170
      %p173 = scmp.ne.s32.totalorder %s156, %s172
      %p174 = scmp.eq.s32.totalorder %s31, 0
      %p175 = por %p173, %p174
      %s177 = sadd.s32 %s176, 1
      %p180 = scmp.eq.s32.totalorder %s25, 11
      %p181 = scmp.ne.s32.totalorder %s176, %s178
      %p182 = scmp.eq.s32.totalorder %s25, 0
      %p183 = por %p181, %p182
      %p184 = scmp.ne.s32.totalorder %s176, %s178
      %p185 = scmp.eq.s32.totalorder %s30, 11
      %p186 = por %p184, %p185
      %p187 = scmp.ne.s32.totalorder %s178, %s179
      %p188 = scmp.eq.s32.totalorder %s30, 0
      %p189 = por %p187, %p188
      %p190 = scmp.ne.s32.totalorder %s178, %s179
      %p191 = scmp.eq.s32.totalorder %s31, 11
      %p192 = por %p190, %p191
      %p194 = scmp.ne.s32.totalorder %s179, %s193
      %p195 = scmp.eq.s32.totalorder %s31, 0
      %p196 = por %p194, %p195
      %s198 = sadd.s32 %s197, 1
      %p201 = scmp.eq.s32.totalorder %s25, 11
      %p202 = scmp.ne.s32.totalorder %s197, %s199
      %p203 = scmp.eq.s32.totalorder %s25, 0
      %p204 = por %p202, %p203
      %p205 = scmp.ne.s32.totalorder %s197, %s199
      %p206 = scmp.eq.s32.totalorder %s30, 11
      %p207 = por %p205, %p206
      %p208 = scmp.ne.s32.totalorder %s199, %s200
      %p209 = scmp.eq.s32.totalorder %s30, 0
      %p210 = por %p208, %p209
      %p211 = scmp.ne.s32.totalorder %s199, %s200
      %p212 = scmp.eq.s32.totalorder %s31, 11
      %p213 = por %p211, %p212
      %p215 = scmp.ne.s32.totalorder %s200, %s214
      %p216 = scmp.eq.s32.totalorder %s31, 0
      %p217 = por %p215, %p216
      %s218 = ssub.s32 %s32, %s51
      %p219 = scmp.eq.s32.totalorder %s218, 0
      %s221 = sadd.s32 %s220, 1
      %s222 = scalar_select %p219, %s220, %s221
      %p225 = pneg %p219
      %p226 = scmp.eq.s32.totalorder %s25, 11
      %p227 = por %p225, %p226
      %p228 = scmp.ne.s32.totalorder %s220, %s223
      %p229 = scmp.eq.s32.totalorder %s25, 0
      %p230 = por %p228, %p229
      %p231 = scmp.ne.s32.totalorder %s220, %s223
      %p232 = scmp.eq.s32.totalorder %s30, 11
      %p233 = por %p231, %p232
      %p234 = scmp.ne.s32.totalorder %s223, %s224
      %p235 = scmp.eq.s32.totalorder %s30, 0
      %p236 = por %p234, %p235
      %p237 = scmp.ne.s32.totalorder %s223, %s224
      %p238 = scmp.eq.s32.totalorder %s31, 11
      %p239 = por %p237, %p238
      %p241 = scmp.ne.s32.totalorder %s224, %s240
      %p242 = scmp.eq.s32.totalorder %s31, 0
      %p243 = por %p241, %p242
      %p244 = scmp.le.s32.totalorder 1, %s25
      %p245 = scmp.lt.s32.totalorder %s25, 13
      %p246 = pnand %p244, %p245
      %p247 = pneg %p246
      // Predicated region
      $region9: #{tpu_custom_call.1} parent=5 // pred_check
        _
      $region10: #{tpu_custom_call.1} parent=5 // pred_check_branch
        %249 = sbr.rel (%p246) target = $region12
      $region11: #{tpu_custom_call.1} parent=5 // pred_region
        %s250 = ssub.s32 %s25, 1
        // Predicated region
        $region13: #{tpu_custom_call.1} parent=11 // pred_check
          %p251 = pneg %p117
        $region14: #{tpu_custom_call.1} parent=11 // pred_check_branch
          %253 = sbr.rel (%p251) target = $region16
        $region15: #{tpu_custom_call.1} parent=11 // pred_region
          %255 = vsyncadd [#allocation9], 0
          %s256 = sshll.u32 %s2, 4
          %s257 = int_to_ptr.hbm [resolvable:$true] %s256
          %s258 = sshll.u32 [#allocation10], 4
          %s259 = int_to_ptr.vmem [resolvable:$true] %s258
          %264 = dma.hbm_to_vmem [thread:$0]  %s257, 3072, %s259, [#allocation9], 64, 64, 4
        $region16: #{tpu_custom_call.1} parent=11 // pred_fallthru
          _
        // Predicated region
        $region17: #{tpu_custom_call.1} parent=11 // pred_check
          %p265 = pneg %p138
        $region18: #{tpu_custom_call.1} parent=11 // pred_check_branch
          %267 = sbr.rel (%p265) target = $region20
        $region19: #{tpu_custom_call.1} parent=11 // pred_region
          _
        $region20: #{tpu_custom_call.1} parent=11 // pred_fallthru
          _
        // Predicated region
        $region21: #{tpu_custom_call.1} parent=11 // pred_check
          %p268 = pneg %p189
        $region22: #{tpu_custom_call.1} parent=11 // pred_check_branch
          %270 = sbr.rel (%p268) target = $region24
        $region23: #{tpu_custom_call.1} parent=11 // pred_region
          _
        $region24: #{tpu_custom_call.1} parent=11 // pred_fallthru
          _
        // Predicated region
        $region25: #{tpu_custom_call.1} parent=11 // pred_check
          %p271 = pneg %p210
        $region26: #{tpu_custom_call.1} parent=11 // pred_check_branch
          %273 = sbr.rel (%p271) target = $region28
        $region27: #{tpu_custom_call.1} parent=11 // pred_region
          _
        $region28: #{tpu_custom_call.1} parent=11 // pred_fallthru
          _
      $region12: #{tpu_custom_call.1} parent=5 // pred_fallthru
        _
      %p274 = scmp.lt.s32.totalorder %s25, 12
      // Predicated region
      $region29: #{tpu_custom_call.1} parent=5 // pred_check
        %p275 = pneg %p274
      $region30: #{tpu_custom_call.1} parent=5 // pred_check_branch
        %277 = sbr.rel (%p275) target = $region32
      $region31: #{tpu_custom_call.1} parent=5 // pred_region
        // Predicated region
        $region33: #{tpu_custom_call.1} parent=31 // pred_check
          %p278 = pneg %p64
        $region34: #{tpu_custom_call.1} parent=31 // pred_check_branch
          %280 = sbr.rel (%p278) target = $region36
        $region35: #{tpu_custom_call.1} parent=31 // pred_region
          %s281 = sand.u32 %s54, 1
          %s282 = scalar_lea.sflag [#allocation6], %s281
          %s283 = sand.u32 %s54, 1
          %s284 = smul.addr %s283, 64
          %s285 = scalar_lea.vmem [#allocation5], %s284
          %s286 = smul.u32 16, %s32
          %288 = vsyncadd %s282, 0
          %s289 = smul.addr %s286, 4
          %s290 = scalar_lea.hbm %s0, %s289
          %s291 = sshll.u32 %s290, 4
          %s292 = int_to_ptr.hbm [resolvable:$true] %s291
          %s293 = sshll.u32 %s285, 4
          %s294 = int_to_ptr.vmem [resolvable:$true] %s293
          %299 = dma.hbm_to_vmem [thread:$0]  %s292, 1024, %s294, %s282, 64, 64, 4
        $region36: #{tpu_custom_call.1} parent=31 // pred_fallthru
          _
        // Predicated region
        $region37: #{tpu_custom_call.1} parent=31 // pred_check
          %p300 = pneg %p90
        $region38: #{tpu_custom_call.1} parent=31 // pred_check_branch
          %302 = sbr.rel (%p300) target = $region40
        $region39: #{tpu_custom_call.1} parent=31 // pred_region
          %s303 = sand.u32 %s25, 1
          %s304 = scalar_lea.sflag [#allocation9], %s303
          %s305 = sand.u32 %s80, 1
          %s306 = smul.addr %s305, 64
          %s307 = scalar_lea.vmem [#allocation8], %s306
          %s308 = smul.u32 16, %s33
          %310 = vsyncadd %s304, 0
          %s311 = smul.addr %s308, 4
          %s312 = scalar_lea.hbm %s1, %s311
          %s313 = sshll.u32 %s312, 4
          %s314 = int_to_ptr.hbm [resolvable:$true] %s313
          %s315 = sshll.u32 %s307, 4
          %s316 = int_to_ptr.vmem [resolvable:$true] %s315
          %321 = dma.hbm_to_vmem [thread:$0]  %s314, 1024, %s316, %s304, 64, 64, 4
        $region40: #{tpu_custom_call.1} parent=31 // pred_fallthru
          _
        // Predicated region
        $region41: #{tpu_custom_call.1} parent=31 // pred_check
          %p322 = pneg %p162
        $region42: #{tpu_custom_call.1} parent=31 // pred_check_branch
          %324 = sbr.rel (%p322) target = $region44
        $region43: #{tpu_custom_call.1} parent=31 // pred_region
          %s325 = sand.u32 %s152, 1
          %s326 = scalar_lea.sflag [#allocation12], %s325
          %s327 = sand.u32 %s152, 1
          %s328 = smul.addr %s327, 32
          %s329 = scalar_lea.vmem [#allocation11], %s328
          %s330 = smul.u32 4, %s32
          %332 = vsyncadd %s326, 0
          %s333 = smul.addr %s330, 2
          %s334 = sadd.s32 %s33, %s333
          %s335 = smul.addr %s34, 16
          %s336 = sadd.s32 %s334, %s335
          %s337 = smul.addr %s336, 8
          %s338 = scalar_lea.hbm %s4, %s337
          %s339 = sshll.u32 %s338, 4
          %s340 = int_to_ptr.hbm [resolvable:$true] %s339
          %s341 = sshll.u32 %s329, 4
          %s342 = int_to_ptr.vmem [resolvable:$true] %s341
          %347 = dma.hbm_to_vmem [thread:$0]  %s340, 512, %s342, %s326, 256, 128, 8
        $region44: #{tpu_custom_call.1} parent=31 // pred_fallthru
          _
      $region32: #{tpu_custom_call.1} parent=5 // pred_fallthru
        _
      %p348 = scmp.le.s32.totalorder 1, %s25
      %p349 = scmp.lt.s32.totalorder %s25, 13
      %p350 = pnand %p348, %p349
      %p351 = pneg %p350
      // Predicated region
      $region45: #{tpu_custom_call.1} parent=5 // pred_check
        _
      $region46: #{tpu_custom_call.1} parent=5 // pred_check_branch
        %353 = sbr.rel (%p350) target = $region48
      $region47: #{tpu_custom_call.1} parent=5 // pred_region
        %s354 = ssub.s32 %s25, 1
        %s355 = sand.u32 %s57, 1
        %s356 = scalar_lea.sflag [#allocation6], %s355
        %s357 = sand.u32 %s57, 1
        %s358 = smul.addr %s357, 64
        %s359 = scalar_lea.vmem [#allocation5], %s358
        // Predicated region
        $region49: #{tpu_custom_call.1} parent=47 // pred_check
          %p360 = pneg %p70
        $region50: #{tpu_custom_call.1} parent=47 // pred_check_branch
          %362 = sbr.rel (%p360) target = $region52
        $region51: #{tpu_custom_call.1} parent=47 // pred_region
          %364 = dma.done %s356, 1024
        $region52: #{tpu_custom_call.1} parent=47 // pred_fallthru
          _
        %s365 = sand.u32 %s30, 1
        %s366 = scalar_lea.sflag [#allocation9], %s365
        %s367 = sand.u32 %s83, 1
        %s368 = smul.addr %s367, 64
        %s369 = scalar_lea.vmem [#allocation8], %s368
        // Predicated region
        $region53: #{tpu_custom_call.1} parent=47 // pred_check
          %p370 = pneg %p96
        $region54: #{tpu_custom_call.1} parent=47 // pred_check_branch
          %372 = sbr.rel (%p370) target = $region56
        $region55: #{tpu_custom_call.1} parent=47 // pred_region
          %374 = dma.done %s366, 1024
        $region56: #{tpu_custom_call.1} parent=47 // pred_fallthru
          _
        // Predicated region
        $region57: #{tpu_custom_call.1} parent=47 // pred_check
          %p375 = pneg %p117
        $region58: #{tpu_custom_call.1} parent=47 // pred_check_branch
          %377 = sbr.rel (%p375) target = $region60
        $region59: #{tpu_custom_call.1} parent=47 // pred_region
          %379 = dma.done [#allocation9], 3072
        $region60: #{tpu_custom_call.1} parent=47 // pred_fallthru
          _
        %s380 = sand.u32 %s155, 1
        %s381 = scalar_lea.sflag [#allocation12], %s380
        %s382 = sand.u32 %s155, 1
        %s383 = smul.addr %s382, 32
        %s384 = scalar_lea.vmem [#allocation11], %s383
        // Predicated region
        $region61: #{tpu_custom_call.1} parent=47 // pred_check
          %p385 = pneg %p168
        $region62: #{tpu_custom_call.1} parent=47 // pred_check_branch
          %387 = sbr.rel (%p385) target = $region64
        $region63: #{tpu_custom_call.1} parent=47 // pred_region
          %389 = dma.done %s381, 512
        $region64: #{tpu_custom_call.1} parent=47 // pred_fallthru
          _
        %s390 = sand.u32 %s57, 1
        %s391 = scalar_lea.sflag [#allocation6], %s390
        %s392 = sand.u32 %s57, 1
        %s393 = smul.addr %s392, 64
        %s394 = scalar_lea.vmem [#allocation5], %s393
        %p395 = pneg %p70
        %p396 = pneg %p67
        %s397 = sand.u32 %s30, 1
        %s398 = scalar_lea.sflag [#allocation9], %s397
        %s399 = sand.u32 %s83, 1
        %s400 = smul.addr %s399, 64
        %s401 = scalar_lea.vmem [#allocation8], %s400
        %p402 = pneg %p96
        %p403 = pneg %p93
        %p404 = pneg %p117
        %p405 = pneg %p114
        %p406 = pneg %p138
        %p407 = pneg %p135
        %s408 = sand.u32 %s155, 1
        %s409 = scalar_lea.sflag [#allocation12], %s408
        %s410 = sand.u32 %s155, 1
        %s411 = smul.addr %s410, 32
        %s412 = scalar_lea.vmem [#allocation11], %s411
        %p413 = pneg %p168
        %p414 = pneg %p165
        %p415 = pneg %p189
        %p416 = pneg %p186
        %p417 = pneg %p210
        %p418 = pneg %p207
        %p419 = pneg %p236
        %p420 = pneg %p233
        %s421 = sand.u32 %s223, 1
        %s422 = scalar_lea.sflag [#allocation7], %s421
        %s423 = sand.u32 %s223, 1
        %s424 = smul.addr %s423, 128
        %s425 = scalar_lea.vmem [#allocation13], %s424
        %s426 = smul.u32 16, %s35
        %s427 = smul.u32 16, %s36
        %s428 = smul.u32 4, %s35
        %s429 = smul.u32 16, %s35
        %p432 = scmp.eq.s32.totalorder %s36, 0
        %p433 = scmp.eq.s32.totalorder %s37, 0
        %p434 = pnand %p432, %p433
        %p435 = pneg %p434
        // Predicated region
        $region65: #{tpu_custom_call.1} parent=47 // pred_check
          _
        $region66: #{tpu_custom_call.1} parent=47 // pred_check_branch
          %437 = sbr.rel (%p434) target = $region68
        $region67: #{tpu_custom_call.1} parent=47 // pred_region
          %438 = vst [vmem:[#allocation3] sm:$0xff] 0.0
          %439 = vst [vmem:[#allocation3 + $0x8] sm:$0xff] 0.0
          %440 = vst [vmem:[#allocation3 + $0x10] sm:$0xff] 0.0
          %441 = vst [vmem:[#allocation3 + $0x18] sm:$0xff] 0.0
          %442 = vst [vmem:[#allocation3 + $0x20] sm:$0xff] 0.0
          %443 = vst [vmem:[#allocation3 + $0x28] sm:$0xff] 0.0
          %444 = vst [vmem:[#allocation3 + $0x30] sm:$0xff] 0.0
          %445 = vst [vmem:[#allocation3 + $0x38] sm:$0xff] 0.0
          %446 = vst [vmem:[#allocation3 + $0x40] sm:$0xff] 0.0
          %447 = vst [vmem:[#allocation3 + $0x48] sm:$0xff] 0.0
          %448 = vst [vmem:[#allocation3 + $0x50] sm:$0xff] 0.0
          %449 = vst [vmem:[#allocation3 + $0x58] sm:$0xff] 0.0
          %450 = vst [vmem:[#allocation3 + $0x60] sm:$0xff] 0.0
          %451 = vst [vmem:[#allocation3 + $0x68] sm:$0xff] 0.0
          %452 = vst [vmem:[#allocation3 + $0x70] sm:$0xff] 0.0
          %453 = vst [vmem:[#allocation3 + $0x78] sm:$0xff] 0.0
          %vm454 = vcmask 7168
          %455 = vst.msk [vmem:[#allocation4] sm:$0xff] %vm454, 0.0
          %456 = vst.msk [vmem:[#allocation4 + $0x8] sm:$0xff] %vm454, 0.0
          %457 = vst.msk [vmem:[#allocation4 + $0x10] sm:$0xff] %vm454, 0.0
          %458 = vst.msk [vmem:[#allocation4 + $0x18] sm:$0xff] %vm454, 0.0
          %459 = vst.msk [vmem:[#allocation4 + $0x20] sm:$0xff] %vm454, 0.0
          %460 = vst.msk [vmem:[#allocation4 + $0x28] sm:$0xff] %vm454, 0.0
          %461 = vst.msk [vmem:[#allocation4 + $0x30] sm:$0xff] %vm454, 0.0
          %462 = vst.msk [vmem:[#allocation4 + $0x38] sm:$0xff] %vm454, 0.0
          %463 = vst.msk [vmem:[#allocation4 + $0x40] sm:$0xff] %vm454, 0.0
          %464 = vst.msk [vmem:[#allocation4 + $0x48] sm:$0xff] %vm454, 0.0
          %465 = vst.msk [vmem:[#allocation4 + $0x50] sm:$0xff] %vm454, 0.0
          %466 = vst.msk [vmem:[#allocation4 + $0x58] sm:$0xff] %vm454, 0.0
          %467 = vst.msk [vmem:[#allocation4 + $0x60] sm:$0xff] %vm454, 0.0
          %468 = vst.msk [vmem:[#allocation4 + $0x68] sm:$0xff] %vm454, 0.0
          %469 = vst.msk [vmem:[#allocation4 + $0x70] sm:$0xff] %vm454, 0.0
          %470 = vst.msk [vmem:[#allocation4 + $0x78] sm:$0xff] %vm454, 0.0
          %v471 = vld [vmem:[%s359] sm:$0xf]
          %v472 = vld [vmem:[%s359 + $0x4] sm:$0xf]
          %v473 = vld [vmem:[%s359 + $0x8] sm:$0xf]
          %v474 = vld [vmem:[%s359 + $0xc] sm:$0xf]
          %v475 = vld [vmem:[%s359 + $0x10] sm:$0xf]
          %v476 = vld [vmem:[%s359 + $0x14] sm:$0xf]
          %v477 = vld [vmem:[%s359 + $0x18] sm:$0xf]
          %v478 = vld [vmem:[%s359 + $0x1c] sm:$0xf]
          %v479 = vld [vmem:[%s359 + $0x20] sm:$0xf]
          %v480 = vld [vmem:[%s359 + $0x24] sm:$0xf]
          %v481 = vld [vmem:[%s359 + $0x28] sm:$0xf]
          %v482 = vld [vmem:[%s359 + $0x2c] sm:$0xf]
          %v483 = vld [vmem:[%s359 + $0x30] sm:$0xf]
          %v484 = vld [vmem:[%s359 + $0x34] sm:$0xf]
          %v485 = vld [vmem:[%s359 + $0x38] sm:$0xf]
          %v486 = vld [vmem:[%s359 + $0x3c] sm:$0xf]
          %v487 = vld [vmem:[%s3] sm:$0x3]
          %v489 = vrot.slane %v487, 1
          %v490 = vrot.slane %v487, 2
          %v491 = vrot.slane %v487, 3
          %vm492 = vcmask 1040384
          %v495 = vsel %vm492, %v487, %v489
          %vm496 = vcmask 1042434
          %v499 = vsel %vm496, %v490, %v491
          %vm500 = vcmask 1041408
          %v501 = vsel %vm500, %v495, %v499
          %vm503 = vcmask 1041409
          %v504 = vsel %vm503, %v487, %v489
          %vm505 = vcmask 1043459
          %v506 = vsel %vm505, %v490, %v491
          %vm507 = vcmask 1042433
          %v508 = vsel %vm507, %v504, %v506
          %v510 = vrot.slane %v508, 1
          %v511 = vunpack.i.l.s16 %v501
          %v512 = vunpack.i.h.s16 %v501
          %v513 = vunpack.i.l.s16 %v510
          %v514 = vpack.i.b16 %v511, %v511
          %v515 = vpack.i.b16 %v512, %v512
          %v516 = vpack.i.b16 %v513, %v513
          %v517 = vperm.slane %v514, 0
          %v518 = vperm.slane %v515, 0
          %v519 = vperm.slane %v516, 0
          %v521 = vpack.i.b16 %v517, %v517
          %v523 = vperm.slane %v521, 0
          %v525 = vpack.i.b16 %v518, %v518
          %v527 = vperm.slane %v525, 0
          %v529 = vpack.i.b16 %v519, %v519
          %v531 = vperm.slane %v529, 0
          %v532 = vunpack.c.l.bf16 %v471
          %v533 = vunpack.c.l.bf16 %v472
          %v534 = vunpack.c.l.bf16 %v473
          %v535 = vunpack.c.l.bf16 %v474
          %v536 = vunpack.c.l.bf16 %v475
          %v537 = vunpack.c.l.bf16 %v476
          %v538 = vunpack.c.l.bf16 %v477
          %v539 = vunpack.c.l.bf16 %v478
          %v540 = vunpack.c.l.bf16 %v479
          %v541 = vunpack.c.l.bf16 %v480
          %v542 = vunpack.c.l.bf16 %v481
          %v543 = vunpack.c.l.bf16 %v482
          %v544 = vunpack.c.l.bf16 %v483
          %v545 = vunpack.c.l.bf16 %v484
          %v546 = vunpack.c.l.bf16 %v485
          %v547 = vunpack.c.l.bf16 %v486
          %v548 = vunpack.c.l.bf16 %v523
          %v549 = vunpack.c.l.bf16 %v527
          %v550 = vunpack.c.l.bf16 %v531
          %v551 = vmul.f32 %v532, %v548
          %v552 = vmul.f32 %v533, %v548
          %v553 = vmul.f32 %v534, %v548
          %v554 = vmul.f32 %v535, %v548
          %v555 = vmul.f32 %v536, %v548
          %v556 = vmul.f32 %v537, %v548
          %v557 = vmul.f32 %v538, %v548
          %v558 = vmul.f32 %v539, %v548
          %v559 = vmul.f32 %v540, %v548
          %v560 = vmul.f32 %v541, %v548
          %v561 = vmul.f32 %v542, %v548
          %v562 = vmul.f32 %v543, %v548
          %v563 = vmul.f32 %v544, %v548
          %v564 = vmul.f32 %v545, %v548
          %v565 = vmul.f32 %v546, %v548
          %v566 = vmul.f32 %v547, %v548
          %v567 = vmul.f32 %v532, %v549
          %v568 = vmul.f32 %v533, %v549
          %v569 = vmul.f32 %v534, %v549
          %v570 = vmul.f32 %v535, %v549
          %v571 = vmul.f32 %v536, %v549
          %v572 = vmul.f32 %v537, %v549
          %v573 = vmul.f32 %v538, %v549
          %v574 = vmul.f32 %v539, %v549
          %v575 = vmul.f32 %v540, %v549
          %v576 = vmul.f32 %v541, %v549
          %v577 = vmul.f32 %v542, %v549
          %v578 = vmul.f32 %v543, %v549
          %v579 = vmul.f32 %v544, %v549
          %v580 = vmul.f32 %v545, %v549
          %v581 = vmul.f32 %v546, %v549
          %v582 = vmul.f32 %v547, %v549
          %v583 = vmul.f32 %v532, %v550
          %v584 = vmul.f32 %v533, %v550
          %v585 = vmul.f32 %v534, %v550
          %v586 = vmul.f32 %v535, %v550
          %v587 = vmul.f32 %v536, %v550
          %v588 = vmul.f32 %v537, %v550
          %v589 = vmul.f32 %v538, %v550
          %v590 = vmul.f32 %v539, %v550
          %v591 = vmul.f32 %v540, %v550
          %v592 = vmul.f32 %v541, %v550
          %v593 = vmul.f32 %v542, %v550
          %v594 = vmul.f32 %v543, %v550
          %v595 = vmul.f32 %v544, %v550
          %v596 = vmul.f32 %v545, %v550
          %v597 = vmul.f32 %v546, %v550
          %v598 = vmul.f32 %v547, %v550
          %v599 = vpack.c.bf16 %v551, %v551
          %v600 = vpack.c.bf16 %v552, %v552
          %v601 = vpack.c.bf16 %v553, %v553
          %v602 = vpack.c.bf16 %v554, %v554
          %v603 = vpack.c.bf16 %v555, %v555
          %v604 = vpack.c.bf16 %v556, %v556
          %v605 = vpack.c.bf16 %v557, %v557
          %v606 = vpack.c.bf16 %v558, %v558
          %v607 = vpack.c.bf16 %v559, %v559
          %v608 = vpack.c.bf16 %v560, %v560
          %v609 = vpack.c.bf16 %v561, %v561
          %v610 = vpack.c.bf16 %v562, %v562
          %v611 = vpack.c.bf16 %v563, %v563
          %v612 = vpack.c.bf16 %v564, %v564
          %v613 = vpack.c.bf16 %v565, %v565
          %v614 = vpack.c.bf16 %v566, %v566
          %v615 = vpack.c.bf16 %v567, %v567
          %v616 = vpack.c.bf16 %v568, %v568
          %v617 = vpack.c.bf16 %v569, %v569
          %v618 = vpack.c.bf16 %v570, %v570
          %v619 = vpack.c.bf16 %v571, %v571
          %v620 = vpack.c.bf16 %v572, %v572
          %v621 = vpack.c.bf16 %v573, %v573
          %v622 = vpack.c.bf16 %v574, %v574
          %v623 = vpack.c.bf16 %v575, %v575
          %v624 = vpack.c.bf16 %v576, %v576
          %v625 = vpack.c.bf16 %v577, %v577
          %v626 = vpack.c.bf16 %v578, %v578
          %v627 = vpack.c.bf16 %v579, %v579
          %v628 = vpack.c.bf16 %v580, %v580
          %v629 = vpack.c.bf16 %v581, %v581
          %v630 = vpack.c.bf16 %v582, %v582
          %v631 = vpack.c.bf16 %v583, %v583
          %v632 = vpack.c.bf16 %v584, %v584
          %v633 = vpack.c.bf16 %v585, %v585
          %v634 = vpack.c.bf16 %v586, %v586
          %v635 = vpack.c.bf16 %v587, %v587
          %v636 = vpack.c.bf16 %v588, %v588
          %v637 = vpack.c.bf16 %v589, %v589
          %v638 = vpack.c.bf16 %v590, %v590
          %v639 = vpack.c.bf16 %v591, %v591
          %v640 = vpack.c.bf16 %v592, %v592
          %v641 = vpack.c.bf16 %v593, %v593
          %v642 = vpack.c.bf16 %v594, %v594
          %v643 = vpack.c.bf16 %v595, %v595
          %v644 = vpack.c.bf16 %v596, %v596
          %v645 = vpack.c.bf16 %v597, %v597
          %v646 = vpack.c.bf16 %v598, %v598
          %v647 = vld [vmem:[#allocation10] sm:$0xf]
          %v648 = vld [vmem:[#allocation10 + $0x4] sm:$0xf]
          %v649 = vld [vmem:[#allocation10 + $0x8] sm:$0xf]
          %v650 = vld [vmem:[#allocation10 + $0xc] sm:$0xf]
          %v651 = vld [vmem:[#allocation10 + $0x10] sm:$0xf]
          %v652 = vld [vmem:[#allocation10 + $0x14] sm:$0xf]
          %v653 = vld [vmem:[#allocation10 + $0x18] sm:$0xf]
          %v654 = vld [vmem:[#allocation10 + $0x1c] sm:$0xf]
          %v655 = vld [vmem:[#allocation10 + $0x20] sm:$0xf]
          %v656 = vld [vmem:[#allocation10 + $0x24] sm:$0xf]
          %v657 = vld [vmem:[#allocation10 + $0x28] sm:$0xf]
          %v658 = vld [vmem:[#allocation10 + $0x2c] sm:$0xf]
          %v659 = vld [vmem:[#allocation10 + $0x30] sm:$0xf]
          %v660 = vld [vmem:[#allocation10 + $0x34] sm:$0xf]
          %v661 = vld [vmem:[#allocation10 + $0x38] sm:$0xf]
          %v662 = vld [vmem:[#allocation10 + $0x3c] sm:$0xf]
          %v663 = vld [vmem:[#allocation10 + $0x40] sm:$0xf]
          %v664 = vld [vmem:[#allocation10 + $0x44] sm:$0xf]
          %v665 = vld [vmem:[#allocation10 + $0x48] sm:$0xf]
          %v666 = vld [vmem:[#allocation10 + $0x4c] sm:$0xf]
          %v667 = vld [vmem:[#allocation10 + $0x50] sm:$0xf]
          %v668 = vld [vmem:[#allocation10 + $0x54] sm:$0xf]
          %v669 = vld [vmem:[#allocation10 + $0x58] sm:$0xf]
          %v670 = vld [vmem:[#allocation10 + $0x5c] sm:$0xf]
          %v671 = vld [vmem:[#allocation10 + $0x60] sm:$0xf]
          %v672 = vld [vmem:[#allocation10 + $0x64] sm:$0xf]
          %v673 = vld [vmem:[#allocation10 + $0x68] sm:$0xf]
          %v674 = vld [vmem:[#allocation10 + $0x6c] sm:$0xf]
          %v675 = vld [vmem:[#allocation10 + $0x70] sm:$0xf]
          %v676 = vld [vmem:[#allocation10 + $0x74] sm:$0xf]
          %v677 = vld [vmem:[#allocation10 + $0x78] sm:$0xf]
          %v678 = vld [vmem:[#allocation10 + $0x7c] sm:$0xf]
          %v679 = vld [vmem:[#allocation10 + $0x80] sm:$0xf]
          %v680 = vld [vmem:[#allocation10 + $0x84] sm:$0xf]
          %v681 = vld [vmem:[#allocation10 + $0x88] sm:$0xf]
          %v682 = vld [vmem:[#allocation10 + $0x8c] sm:$0xf]
          %v683 = vld [vmem:[#allocation10 + $0x90] sm:$0xf]
          %v684 = vld [vmem:[#allocation10 + $0x94] sm:$0xf]
          %v685 = vld [vmem:[#allocation10 + $0x98] sm:$0xf]
          %v686 = vld [vmem:[#allocation10 + $0x9c] sm:$0xf]
          %v687 = vld [vmem:[#allocation10 + $0xa0] sm:$0xf]
          %v688 = vld [vmem:[#allocation10 + $0xa4] sm:$0xf]
          %v689 = vld [vmem:[#allocation10 + $0xa8] sm:$0xf]
          %v690 = vld [vmem:[#allocation10 + $0xac] sm:$0xf]
          %v691 = vld [vmem:[#allocation10 + $0xb0] sm:$0xf]
          %v692 = vld [vmem:[#allocation10 + $0xb4] sm:$0xf]
          %v693 = vld [vmem:[#allocation10 + $0xb8] sm:$0xf]
          %v694 = vld [vmem:[#allocation10 + $0xbc] sm:$0xf]
          %v711 = vunpack.c.l.b16 %v599
          %v712 = vunpack.c.l.b16 %v600
          %v713 = vunpack.c.l.b16 %v601
          %v714 = vunpack.c.l.b16 %v602
          %v715 = vunpack.c.l.b16 %v603
          %v716 = vunpack.c.l.b16 %v604
          %v717 = vunpack.c.l.b16 %v605
          %v718 = vunpack.c.l.b16 %v606
          %v719 = vunpack.c.l.b16 %v607
          %v720 = vunpack.c.l.b16 %v608
          %v721 = vunpack.c.l.b16 %v609
          %v722 = vunpack.c.l.b16 %v610
          %v723 = vunpack.c.l.b16 %v611
          %v724 = vunpack.c.l.b16 %v612
          %v725 = vunpack.c.l.b16 %v613
          %v726 = vunpack.c.l.b16 %v614
          %v727 = vpack.c.b16 %v712, %v711
          %v728 = vpack.c.b16 %v714, %v713
          %v729 = vpack.c.b16 %v716, %v715
          %v730 = vpack.c.b16 %v718, %v717
          %v731 = vpack.c.b16 %v720, %v719
          %v732 = vpack.c.b16 %v722, %v721
          %v733 = vpack.c.b16 %v724, %v723
          %v734 = vpack.c.b16 %v726, %v725
          %v759 = vunpack.c.l.b16 %v647
          %v760 = vunpack.c.l.b16 %v648
          %v761 = vunpack.c.l.b16 %v649
          %v762 = vunpack.c.l.b16 %v650
          %v763 = vunpack.c.l.b16 %v651
          %v764 = vunpack.c.l.b16 %v652
          %v765 = vunpack.c.l.b16 %v653
          %v766 = vunpack.c.l.b16 %v654
          %v767 = vunpack.c.l.b16 %v655
          %v768 = vunpack.c.l.b16 %v656
          %v769 = vunpack.c.l.b16 %v657
          %v770 = vunpack.c.l.b16 %v658
          %v771 = vunpack.c.l.b16 %v659
          %v772 = vunpack.c.l.b16 %v660
          %v773 = vunpack.c.l.b16 %v661
          %v774 = vunpack.c.l.b16 %v662
          %v775 = vpack.c.b16 %v760, %v759
          %v776 = vpack.c.b16 %v762, %v761
          %v777 = vpack.c.b16 %v764, %v763
          %v778 = vpack.c.b16 %v766, %v765
          %v779 = vpack.c.b16 %v768, %v767
          %v780 = vpack.c.b16 %v770, %v769
          %v781 = vpack.c.b16 %v772, %v771
          %v782 = vpack.c.b16 %v774, %v773
          %791 = vmatpush.bf16.msra.mxu0 %v782
          %792 = vmatpush.bf16.msra.mxu0 %v781
          %793 = vmatpush.bf16.msra.mxu0 %v780
          %794 = vmatpush.bf16.msra.mxu0 %v779
          %795 = vmatpush.bf16.msra.mxu0 %v778
          %796 = vmatpush.bf16.msra.mxu0 %v777
          %797 = vmatpush.bf16.msra.mxu0 %v776
          %798 = vmatpush.bf16.msra.mxu0 %v775
          %799 = vmatmul.bf16.gmra.mxu0 %v727
          %v800 = vpop.f32.mrf.mxu0
          %v801 = vadd.f32 0.0, %v800
          %v802 = vpop.f32.mrf.mxu0
          %v803 = vadd.f32 0.0, %v802
          %804 = vmatmul.bf16.gmra.mxu0 %v728
          %v805 = vpop.f32.mrf.mxu0
          %v806 = vadd.f32 0.0, %v805
          %v807 = vpop.f32.mrf.mxu0
          %v808 = vadd.f32 0.0, %v807
          %809 = vmatmul.bf16.gmra.mxu0 %v729
          %v810 = vpop.f32.mrf.mxu0
          %v811 = vadd.f32 0.0, %v810
          %v812 = vpop.f32.mrf.mxu0
          %v813 = vadd.f32 0.0, %v812
          %814 = vmatmul.bf16.gmra.mxu0 %v730
          %v815 = vpop.f32.mrf.mxu0
          %v816 = vadd.f32 0.0, %v815
          %v817 = vpop.f32.mrf.mxu0
          %v818 = vadd.f32 0.0, %v817
          %819 = vmatmul.bf16.gmra.mxu0 %v731
          %v820 = vpop.f32.mrf.mxu0
          %v821 = vadd.f32 0.0, %v820
          %v822 = vpop.f32.mrf.mxu0
          %v823 = vadd.f32 0.0, %v822
          %824 = vmatmul.bf16.gmra.mxu0 %v732
          %v825 = vpop.f32.mrf.mxu0
          %v826 = vadd.f32 0.0, %v825
          %v827 = vpop.f32.mrf.mxu0
          %v828 = vadd.f32 0.0, %v827
          %829 = vmatmul.bf16.gmra.mxu0 %v733
          %v830 = vpop.f32.mrf.mxu0
          %v831 = vadd.f32 0.0, %v830
          %v832 = vpop.f32.mrf.mxu0
          %v833 = vadd.f32 0.0, %v832
          %834 = vmatmul.bf16.gmra.mxu0 %v734
          %v835 = vpop.f32.mrf.mxu0
          %v836 = vadd.f32 0.0, %v835
          %v837 = vpop.f32.mrf.mxu0
          %v838 = vadd.f32 0.0, %v837
          %839 = vdwg.mxu0
          %v856 = vunpack.c.l.b16 %v615
          %v857 = vunpack.c.l.b16 %v616
          %v858 = vunpack.c.l.b16 %v617
          %v859 = vunpack.c.l.b16 %v618
          %v860 = vunpack.c.l.b16 %v619
          %v861 = vunpack.c.l.b16 %v620
          %v862 = vunpack.c.l.b16 %v621
          %v863 = vunpack.c.l.b16 %v622
          %v864 = vunpack.c.l.b16 %v623
          %v865 = vunpack.c.l.b16 %v624
          %v866 = vunpack.c.l.b16 %v625
          %v867 = vunpack.c.l.b16 %v626
          %v868 = vunpack.c.l.b16 %v627
          %v869 = vunpack.c.l.b16 %v628
          %v870 = vunpack.c.l.b16 %v629
          %v871 = vunpack.c.l.b16 %v630
          %v872 = vpack.c.b16 %v857, %v856
          %v873 = vpack.c.b16 %v859, %v858
          %v874 = vpack.c.b16 %v861, %v860
          %v875 = vpack.c.b16 %v863, %v862
          %v876 = vpack.c.b16 %v865, %v864
          %v877 = vpack.c.b16 %v867, %v866
          %v878 = vpack.c.b16 %v869, %v868
          %v879 = vpack.c.b16 %v871, %v870
          %v904 = vunpack.c.l.b16 %v663
          %v905 = vunpack.c.l.b16 %v664
          %v906 = vunpack.c.l.b16 %v665
          %v907 = vunpack.c.l.b16 %v666
          %v908 = vunpack.c.l.b16 %v667
          %v909 = vunpack.c.l.b16 %v668
          %v910 = vunpack.c.l.b16 %v669
          %v911 = vunpack.c.l.b16 %v670
          %v912 = vunpack.c.l.b16 %v671
          %v913 = vunpack.c.l.b16 %v672
          %v914 = vunpack.c.l.b16 %v673
          %v915 = vunpack.c.l.b16 %v674
          %v916 = vunpack.c.l.b16 %v675
          %v917 = vunpack.c.l.b16 %v676
          %v918 = vunpack.c.l.b16 %v677
          %v919 = vunpack.c.l.b16 %v678
          %v920 = vpack.c.b16 %v905, %v904
          %v921 = vpack.c.b16 %v907, %v906
          %v922 = vpack.c.b16 %v909, %v908
          %v923 = vpack.c.b16 %v911, %v910
          %v924 = vpack.c.b16 %v913, %v912
          %v925 = vpack.c.b16 %v915, %v914
          %v926 = vpack.c.b16 %v917, %v916
          %v927 = vpack.c.b16 %v919, %v918
          %936 = vmatpush.bf16.msra.mxu0 %v927
          %937 = vmatpush.bf16.msra.mxu0 %v926
          %938 = vmatpush.bf16.msra.mxu0 %v925
          %939 = vmatpush.bf16.msra.mxu0 %v924
          %940 = vmatpush.bf16.msra.mxu0 %v923
          %941 = vmatpush.bf16.msra.mxu0 %v922
          %942 = vmatpush.bf16.msra.mxu0 %v921
          %943 = vmatpush.bf16.msra.mxu0 %v920
          %944 = vmatmul.bf16.gmra.mxu0 %v872
          %v945 = vpop.f32.mrf.mxu0
          %v946 = vadd.f32 0.0, %v945
          %v947 = vpop.f32.mrf.mxu0
          %v948 = vadd.f32 0.0, %v947
          %949 = vmatmul.bf16.gmra.mxu0 %v873
          %v950 = vpop.f32.mrf.mxu0
          %v951 = vadd.f32 0.0, %v950
          %v952 = vpop.f32.mrf.mxu0
          %v953 = vadd.f32 0.0, %v952
          %954 = vmatmul.bf16.gmra.mxu0 %v874
          %v955 = vpop.f32.mrf.mxu0
          %v956 = vadd.f32 0.0, %v955
          %v957 = vpop.f32.mrf.mxu0
          %v958 = vadd.f32 0.0, %v957
          %959 = vmatmul.bf16.gmra.mxu0 %v875
          %v960 = vpop.f32.mrf.mxu0
          %v961 = vadd.f32 0.0, %v960
          %v962 = vpop.f32.mrf.mxu0
          %v963 = vadd.f32 0.0, %v962
          %964 = vmatmul.bf16.gmra.mxu0 %v876
          %v965 = vpop.f32.mrf.mxu0
          %v966 = vadd.f32 0.0, %v965
          %v967 = vpop.f32.mrf.mxu0
          %v968 = vadd.f32 0.0, %v967
          %969 = vmatmul.bf16.gmra.mxu0 %v877
          %v970 = vpop.f32.mrf.mxu0
          %v971 = vadd.f32 0.0, %v970
          %v972 = vpop.f32.mrf.mxu0
          %v973 = vadd.f32 0.0, %v972
          %974 = vmatmul.bf16.gmra.mxu0 %v878
          %v975 = vpop.f32.mrf.mxu0
          %v976 = vadd.f32 0.0, %v975
          %v977 = vpop.f32.mrf.mxu0
          %v978 = vadd.f32 0.0, %v977
          %979 = vmatmul.bf16.gmra.mxu0 %v879
          %v980 = vpop.f32.mrf.mxu0
          %v981 = vadd.f32 0.0, %v980
          %v982 = vpop.f32.mrf.mxu0
          %v983 = vadd.f32 0.0, %v982
          %984 = vdwg.mxu0
          %v1001 = vunpack.c.l.b16 %v631
          %v1002 = vunpack.c.l.b16 %v632
          %v1003 = vunpack.c.l.b16 %v633
          %v1004 = vunpack.c.l.b16 %v634
          %v1005 = vunpack.c.l.b16 %v635
          %v1006 = vunpack.c.l.b16 %v636
          %v1007 = vunpack.c.l.b16 %v637
          %v1008 = vunpack.c.l.b16 %v638
          %v1009 = vunpack.c.l.b16 %v639
          %v1010 = vunpack.c.l.b16 %v640
          %v1011 = vunpack.c.l.b16 %v641
          %v1012 = vunpack.c.l.b16 %v642
          %v1013 = vunpack.c.l.b16 %v643
          %v1014 = vunpack.c.l.b16 %v644
          %v1015 = vunpack.c.l.b16 %v645
          %v1016 = vunpack.c.l.b16 %v646
          %v1017 = vpack.c.b16 %v1002, %v1001
          %v1018 = vpack.c.b16 %v1004, %v1003
          %v1019 = vpack.c.b16 %v1006, %v1005
          %v1020 = vpack.c.b16 %v1008, %v1007
          %v1021 = vpack.c.b16 %v1010, %v1009
          %v1022 = vpack.c.b16 %v1012, %v1011
          %v1023 = vpack.c.b16 %v1014, %v1013
          %v1024 = vpack.c.b16 %v1016, %v1015
          %v1049 = vunpack.c.l.b16 %v679
          %v1050 = vunpack.c.l.b16 %v680
          %v1051 = vunpack.c.l.b16 %v681
          %v1052 = vunpack.c.l.b16 %v682
          %v1053 = vunpack.c.l.b16 %v683
          %v1054 = vunpack.c.l.b16 %v684
          %v1055 = vunpack.c.l.b16 %v685
          %v1056 = vunpack.c.l.b16 %v686
          %v1057 = vunpack.c.l.b16 %v687
          %v1058 = vunpack.c.l.b16 %v688
          %v1059 = vunpack.c.l.b16 %v689
          %v1060 = vunpack.c.l.b16 %v690
          %v1061 = vunpack.c.l.b16 %v691
          %v1062 = vunpack.c.l.b16 %v692
          %v1063 = vunpack.c.l.b16 %v693
          %v1064 = vunpack.c.l.b16 %v694
          %v1065 = vpack.c.b16 %v1050, %v1049
          %v1066 = vpack.c.b16 %v1052, %v1051
          %v1067 = vpack.c.b16 %v1054, %v1053
          %v1068 = vpack.c.b16 %v1056, %v1055
          %v1069 = vpack.c.b16 %v1058, %v1057
          %v1070 = vpack.c.b16 %v1060, %v1059
          %v1071 = vpack.c.b16 %v1062, %v1061
          %v1072 = vpack.c.b16 %v1064, %v1063
          %1081 = vmatpush.bf16.msra.mxu0 %v1072
          %1082 = vmatpush.bf16.msra.mxu0 %v1071
          %1083 = vmatpush.bf16.msra.mxu0 %v1070
          %1084 = vmatpush.bf16.msra.mxu0 %v1069
          %1085 = vmatpush.bf16.msra.mxu0 %v1068
          %1086 = vmatpush.bf16.msra.mxu0 %v1067
          %1087 = vmatpush.bf16.msra.mxu0 %v1066
          %1088 = vmatpush.bf16.msra.mxu0 %v1065
          %1089 = vmatmul.bf16.gmra.mxu0 %v1017
          %v1090 = vpop.f32.mrf.mxu0
          %v1091 = vadd.f32 0.0, %v1090
          %v1092 = vpop.f32.mrf.mxu0
          %v1093 = vadd.f32 0.0, %v1092
          %1094 = vmatmul.bf16.gmra.mxu0 %v1018
          %v1095 = vpop.f32.mrf.mxu0
          %v1096 = vadd.f32 0.0, %v1095
          %v1097 = vpop.f32.mrf.mxu0
          %v1098 = vadd.f32 0.0, %v1097
          %1099 = vmatmul.bf16.gmra.mxu0 %v1019
          %v1100 = vpop.f32.mrf.mxu0
          %v1101 = vadd.f32 0.0, %v1100
          %v1102 = vpop.f32.mrf.mxu0
          %v1103 = vadd.f32 0.0, %v1102
          %1104 = vmatmul.bf16.gmra.mxu0 %v1020
          %v1105 = vpop.f32.mrf.mxu0
          %v1106 = vadd.f32 0.0, %v1105
          %v1107 = vpop.f32.mrf.mxu0
          %v1108 = vadd.f32 0.0, %v1107
          %1109 = vmatmul.bf16.gmra.mxu0 %v1021
          %v1110 = vpop.f32.mrf.mxu0
          %v1111 = vadd.f32 0.0, %v1110
          %v1112 = vpop.f32.mrf.mxu0
          %v1113 = vadd.f32 0.0, %v1112
          %1114 = vmatmul.bf16.gmra.mxu0 %v1022
          %v1115 = vpop.f32.mrf.mxu0
          %v1116 = vadd.f32 0.0, %v1115
          %v1117 = vpop.f32.mrf.mxu0
          %v1118 = vadd.f32 0.0, %v1117
          %1119 = vmatmul.bf16.gmra.mxu0 %v1023
          %v1120 = vpop.f32.mrf.mxu0
          %v1121 = vadd.f32 0.0, %v1120
          %v1122 = vpop.f32.mrf.mxu0
          %v1123 = vadd.f32 0.0, %v1122
          %1124 = vmatmul.bf16.gmra.mxu0 %v1024
          %v1125 = vpop.f32.mrf.mxu0
          %v1126 = vadd.f32 0.0, %v1125
          %v1127 = vpop.f32.mrf.mxu0
          %v1128 = vadd.f32 0.0, %v1127
          %1129 = vdwg.mxu0
          %v1130 = vpack.c.bf16 %v801, %v801
          %v1131 = vpack.c.bf16 %v803, %v803
          %v1132 = vpack.c.bf16 %v806, %v806
          %v1133 = vpack.c.bf16 %v808, %v808
          %v1134 = vpack.c.bf16 %v811, %v811
          %v1135 = vpack.c.bf16 %v813, %v813
          %v1136 = vpack.c.bf16 %v816, %v816
          %v1137 = vpack.c.bf16 %v818, %v818
          %v1138 = vpack.c.bf16 %v821, %v821
          %v1139 = vpack.c.bf16 %v823, %v823
          %v1140 = vpack.c.bf16 %v826, %v826
          %v1141 = vpack.c.bf16 %v828, %v828
          %v1142 = vpack.c.bf16 %v831, %v831
          %v1143 = vpack.c.bf16 %v833, %v833
          %v1144 = vpack.c.bf16 %v836, %v836
          %v1145 = vpack.c.bf16 %v838, %v838
          %v1146 = vpack.c.bf16 %v946, %v946
          %v1147 = vpack.c.bf16 %v948, %v948
          %v1148 = vpack.c.bf16 %v951, %v951
          %v1149 = vpack.c.bf16 %v953, %v953
          %v1150 = vpack.c.bf16 %v956, %v956
          %v1151 = vpack.c.bf16 %v958, %v958
          %v1152 = vpack.c.bf16 %v961, %v961
          %v1153 = vpack.c.bf16 %v963, %v963
          %v1154 = vpack.c.bf16 %v966, %v966
          %v1155 = vpack.c.bf16 %v968, %v968
          %v1156 = vpack.c.bf16 %v971, %v971
          %v1157 = vpack.c.bf16 %v973, %v973
          %v1158 = vpack.c.bf16 %v976, %v976
          %v1159 = vpack.c.bf16 %v978, %v978
          %v1160 = vpack.c.bf16 %v981, %v981
          %v1161 = vpack.c.bf16 %v983, %v983
          %v1162 = vpack.c.bf16 %v1091, %v1091
          %v1163 = vpack.c.bf16 %v1093, %v1093
          %v1164 = vpack.c.bf16 %v1096, %v1096
          %v1165 = vpack.c.bf16 %v1098, %v1098
          %v1166 = vpack.c.bf16 %v1101, %v1101
          %v1167 = vpack.c.bf16 %v1103, %v1103
          %v1168 = vpack.c.bf16 %v1106, %v1106
          %v1169 = vpack.c.bf16 %v1108, %v1108
          %v1170 = vpack.c.bf16 %v1111, %v1111
          %v1171 = vpack.c.bf16 %v1113, %v1113
          %v1172 = vpack.c.bf16 %v1116, %v1116
          %v1173 = vpack.c.bf16 %v1118, %v1118
          %v1174 = vpack.c.bf16 %v1121, %v1121
          %v1175 = vpack.c.bf16 %v1123, %v1123
          %v1176 = vpack.c.bf16 %v1126, %v1126
          %v1177 = vpack.c.bf16 %v1128, %v1128
          %1178 = vst [vmem:[#allocation2] sm:$0xf] %v1130
          %1179 = vst [vmem:[#allocation2 + $0x4] sm:$0xf] %v1131
          %1180 = vst [vmem:[#allocation2 + $0x8] sm:$0xf] %v1132
          %1181 = vst [vmem:[#allocation2 + $0xc] sm:$0xf] %v1133
          %1182 = vst [vmem:[#allocation2 + $0x10] sm:$0xf] %v1134
          %1183 = vst [vmem:[#allocation2 + $0x14] sm:$0xf] %v1135
          %1184 = vst [vmem:[#allocation2 + $0x18] sm:$0xf] %v1136
          %1185 = vst [vmem:[#allocation2 + $0x1c] sm:$0xf] %v1137
          %1186 = vst [vmem:[#allocation2 + $0x20] sm:$0xf] %v1138
          %1187 = vst [vmem:[#allocation2 + $0x24] sm:$0xf] %v1139
          %1188 = vst [vmem:[#allocation2 + $0x28] sm:$0xf] %v1140
          %1189 = vst [vmem:[#allocation2 + $0x2c] sm:$0xf] %v1141
          %1190 = vst [vmem:[#allocation2 + $0x30] sm:$0xf] %v1142
          %1191 = vst [vmem:[#allocation2 + $0x34] sm:$0xf] %v1143
          %1192 = vst [vmem:[#allocation2 + $0x38] sm:$0xf] %v1144
          %1193 = vst [vmem:[#allocation2 + $0x3c] sm:$0xf] %v1145
          %1194 = vst [vmem:[#allocation2 + $0x40] sm:$0xf] %v1146
          %1195 = vst [vmem:[#allocation2 + $0x44] sm:$0xf] %v1147
          %1196 = vst [vmem:[#allocation2 + $0x48] sm:$0xf] %v1148
          %1197 = vst [vmem:[#allocation2 + $0x4c] sm:$0xf] %v1149
          %1198 = vst [vmem:[#allocation2 + $0x50] sm:$0xf] %v1150
          %1199 = vst [vmem:[#allocation2 + $0x54] sm:$0xf] %v1151
          %1200 = vst [vmem:[#allocation2 + $0x58] sm:$0xf] %v1152
          %1201 = vst [vmem:[#allocation2 + $0x5c] sm:$0xf] %v1153
          %1202 = vst [vmem:[#allocation2 + $0x60] sm:$0xf] %v1154
          %1203 = vst [vmem:[#allocation2 + $0x64] sm:$0xf] %v1155
          %1204 = vst [vmem:[#allocation2 + $0x68] sm:$0xf] %v1156
          %1205 = vst [vmem:[#allocation2 + $0x6c] sm:$0xf] %v1157
          %1206 = vst [vmem:[#allocation2 + $0x70] sm:$0xf] %v1158
          %1207 = vst [vmem:[#allocation2 + $0x74] sm:$0xf] %v1159
          %1208 = vst [vmem:[#allocation2 + $0x78] sm:$0xf] %v1160
          %1209 = vst [vmem:[#allocation2 + $0x7c] sm:$0xf] %v1161
          %1210 = vst [vmem:[#allocation2 + $0x80] sm:$0xf] %v1162
          %1211 = vst [vmem:[#allocation2 + $0x84] sm:$0xf] %v1163
          %1212 = vst [vmem:[#allocation2 + $0x88] sm:$0xf] %v1164
          %1213 = vst [vmem:[#allocation2 + $0x8c] sm:$0xf] %v1165
          %1214 = vst [vmem:[#allocation2 + $0x90] sm:$0xf] %v1166
          %1215 = vst [vmem:[#allocation2 + $0x94] sm:$0xf] %v1167
          %1216 = vst [vmem:[#allocation2 + $0x98] sm:$0xf] %v1168
          %1217 = vst [vmem:[#allocation2 + $0x9c] sm:$0xf] %v1169
          %1218 = vst [vmem:[#allocation2 + $0xa0] sm:$0xf] %v1170
          %1219 = vst [vmem:[#allocation2 + $0xa4] sm:$0xf] %v1171
          %1220 = vst [vmem:[#allocation2 + $0xa8] sm:$0xf] %v1172
          %1221 = vst [vmem:[#allocation2 + $0xac] sm:$0xf] %v1173
          %1222 = vst [vmem:[#allocation2 + $0xb0] sm:$0xf] %v1174
          %1223 = vst [vmem:[#allocation2 + $0xb4] sm:$0xf] %v1175
          %1224 = vst [vmem:[#allocation2 + $0xb8] sm:$0xf] %v1176
          %1225 = vst [vmem:[#allocation2 + $0xbc] sm:$0xf] %v1177
        $region68: #{tpu_custom_call.1} parent=47 // pred_fallthru
          _
        %v1226 = vld [vmem:[%s369] sm:$0xf]
        %v1227 = vld [vmem:[%s369 + $0x4] sm:$0xf]
        %v1228 = vld [vmem:[%s369 + $0x8] sm:$0xf]
        %v1229 = vld [vmem:[%s369 + $0xc] sm:$0xf]
        %v1230 = vld [vmem:[%s369 + $0x10] sm:$0xf]
        %v1231 = vld [vmem:[%s369 + $0x14] sm:$0xf]
        %v1232 = vld [vmem:[%s369 + $0x18] sm:$0xf]
        %v1233 = vld [vmem:[%s369 + $0x1c] sm:$0xf]
        %v1234 = vld [vmem:[%s369 + $0x20] sm:$0xf]
        %v1235 = vld [vmem:[%s369 + $0x24] sm:$0xf]
        %v1236 = vld [vmem:[%s369 + $0x28] sm:$0xf]
        %v1237 = vld [vmem:[%s369 + $0x2c] sm:$0xf]
        %v1238 = vld [vmem:[%s369 + $0x30] sm:$0xf]
        %v1239 = vld [vmem:[%s369 + $0x34] sm:$0xf]
        %v1240 = vld [vmem:[%s369 + $0x38] sm:$0xf]
        %v1241 = vld [vmem:[%s369 + $0x3c] sm:$0xf]
        %s1242 = smul.u32 %s37, 16
        %s1243 = smul.addr %s1242, 4
        %s1244 = scalar_lea.vmem [#allocation2], %s1243
        %v1245 = vld [vmem:[%s1244] sm:$0xf]
        %v1246 = vld [vmem:[%s1244 + $0x4] sm:$0xf]
        %v1247 = vld [vmem:[%s1244 + $0x8] sm:$0xf]
        %v1248 = vld [vmem:[%s1244 + $0xc] sm:$0xf]
        %v1249 = vld [vmem:[%s1244 + $0x10] sm:$0xf]
        %v1250 = vld [vmem:[%s1244 + $0x14] sm:$0xf]
        %v1251 = vld [vmem:[%s1244 + $0x18] sm:$0xf]
        %v1252 = vld [vmem:[%s1244 + $0x1c] sm:$0xf]
        %v1253 = vld [vmem:[%s1244 + $0x20] sm:$0xf]
        %v1254 = vld [vmem:[%s1244 + $0x24] sm:$0xf]
        %v1255 = vld [vmem:[%s1244 + $0x28] sm:$0xf]
        %v1256 = vld [vmem:[%s1244 + $0x2c] sm:$0xf]
        %v1257 = vld [vmem:[%s1244 + $0x30] sm:$0xf]
        %v1258 = vld [vmem:[%s1244 + $0x34] sm:$0xf]
        %v1259 = vld [vmem:[%s1244 + $0x38] sm:$0xf]
        %v1260 = vld [vmem:[%s1244 + $0x3c] sm:$0xf]
        %v1277 = vunpack.c.l.b16 %v1245
        %v1278 = vunpack.c.l.b16 %v1246
        %v1279 = vunpack.c.l.b16 %v1247
        %v1280 = vunpack.c.l.b16 %v1248
        %v1281 = vunpack.c.l.b16 %v1249
        %v1282 = vunpack.c.l.b16 %v1250
        %v1283 = vunpack.c.l.b16 %v1251
        %v1284 = vunpack.c.l.b16 %v1252
        %v1285 = vunpack.c.l.b16 %v1253
        %v1286 = vunpack.c.l.b16 %v1254
        %v1287 = vunpack.c.l.b16 %v1255
        %v1288 = vunpack.c.l.b16 %v1256
        %v1289 = vunpack.c.l.b16 %v1257
        %v1290 = vunpack.c.l.b16 %v1258
        %v1291 = vunpack.c.l.b16 %v1259
        %v1292 = vunpack.c.l.b16 %v1260
        %v1293 = vpack.c.b16 %v1278, %v1277
        %v1294 = vpack.c.b16 %v1280, %v1279
        %v1295 = vpack.c.b16 %v1282, %v1281
        %v1296 = vpack.c.b16 %v1284, %v1283
        %v1297 = vpack.c.b16 %v1286, %v1285
        %v1298 = vpack.c.b16 %v1288, %v1287
        %v1299 = vpack.c.b16 %v1290, %v1289
        %v1300 = vpack.c.b16 %v1292, %v1291
        %v1325 = vunpack.c.l.b16 %v1226
        %v1326 = vunpack.c.l.b16 %v1227
        %v1327 = vunpack.c.l.b16 %v1228
        %v1328 = vunpack.c.l.b16 %v1229
        %v1329 = vunpack.c.l.b16 %v1230
        %v1330 = vunpack.c.l.b16 %v1231
        %v1331 = vunpack.c.l.b16 %v1232
        %v1332 = vunpack.c.l.b16 %v1233
        %v1333 = vunpack.c.l.b16 %v1234
        %v1334 = vunpack.c.l.b16 %v1235
        %v1335 = vunpack.c.l.b16 %v1236
        %v1336 = vunpack.c.l.b16 %v1237
        %v1337 = vunpack.c.l.b16 %v1238
        %v1338 = vunpack.c.l.b16 %v1239
        %v1339 = vunpack.c.l.b16 %v1240
        %v1340 = vunpack.c.l.b16 %v1241
        %v1341 = vpack.c.b16 %v1326, %v1325
        %v1342 = vpack.c.b16 %v1328, %v1327
        %v1343 = vpack.c.b16 %v1330, %v1329
        %v1344 = vpack.c.b16 %v1332, %v1331
        %v1345 = vpack.c.b16 %v1334, %v1333
        %v1346 = vpack.c.b16 %v1336, %v1335
        %v1347 = vpack.c.b16 %v1338, %v1337
        %v1348 = vpack.c.b16 %v1340, %v1339
        %1357 = vmatpush.bf16.xpose.msra.mxu0 %v1348
        %1358 = vmatpush.bf16.xpose.msra.mxu0 %v1347
        %1359 = vmatpush.bf16.xpose.msra.mxu0 %v1346
        %1360 = vmatpush.bf16.xpose.msra.mxu0 %v1345
        %1361 = vmatpush.bf16.xpose.msra.mxu0 %v1344
        %1362 = vmatpush.bf16.xpose.msra.mxu0 %v1343
        %1363 = vmatpush.bf16.xpose.msra.mxu0 %v1342
        %1364 = vmatpush.bf16.xpose.msra.mxu0 %v1341
        %1365 = vmatmul.bf16.gmra.mxu0 %v1293
        %v1366 = vpop.f32.mrf.mxu0
        %v1367 = vadd.f32 0.0, %v1366
        %v1368 = vpop.f32.mrf.mxu0
        %v1369 = vadd.f32 0.0, %v1368
        %1370 = vmatmul.bf16.gmra.mxu0 %v1294
        %v1371 = vpop.f32.mrf.mxu0
        %v1372 = vadd.f32 0.0, %v1371
        %v1373 = vpop.f32.mrf.mxu0
        %v1374 = vadd.f32 0.0, %v1373
        %1375 = vmatmul.bf16.gmra.mxu0 %v1295
        %v1376 = vpop.f32.mrf.mxu0
        %v1377 = vadd.f32 0.0, %v1376
        %v1378 = vpop.f32.mrf.mxu0
        %v1379 = vadd.f32 0.0, %v1378
        %1380 = vmatmul.bf16.gmra.mxu0 %v1296
        %v1381 = vpop.f32.mrf.mxu0
        %v1382 = vadd.f32 0.0, %v1381
        %v1383 = vpop.f32.mrf.mxu0
        %v1384 = vadd.f32 0.0, %v1383
        %1385 = vmatmul.bf16.gmra.mxu0 %v1297
        %v1386 = vpop.f32.mrf.mxu0
        %v1387 = vadd.f32 0.0, %v1386
        %v1388 = vpop.f32.mrf.mxu0
        %v1389 = vadd.f32 0.0, %v1388
        %1390 = vmatmul.bf16.gmra.mxu0 %v1298
        %v1391 = vpop.f32.mrf.mxu0
        %v1392 = vadd.f32 0.0, %v1391
        %v1393 = vpop.f32.mrf.mxu0
        %v1394 = vadd.f32 0.0, %v1393
        %1395 = vmatmul.bf16.gmra.mxu0 %v1299
        %v1396 = vpop.f32.mrf.mxu0
        %v1397 = vadd.f32 0.0, %v1396
        %v1398 = vpop.f32.mrf.mxu0
        %v1399 = vadd.f32 0.0, %v1398
        %1400 = vmatmul.bf16.gmra.mxu0 %v1300
        %v1401 = vpop.f32.mrf.mxu0
        %v1402 = vadd.f32 0.0, %v1401
        %v1403 = vpop.f32.mrf.mxu0
        %v1404 = vadd.f32 0.0, %v1403
        %1405 = vdwg.mxu0
        %v1406 = vld [vmem:[%s384] sm:$0xff]
        %v1407 = vld [vmem:[%s384 + $0x8] sm:$0xff]
        %v1408 = vld [vmem:[%s384 + $0x10] sm:$0xff]
        %v1409 = vld [vmem:[%s384 + $0x18] sm:$0xff]
        %vm1410 = vnez %v1406
        %vm1411 = vnez %v1407
        %vm1412 = vnez %v1408
        %vm1413 = vnez %v1409
        %v1414 = vmul.f32 %v1367, 1.442695
        %v1415 = vpow.pop %v1414
        %v1416 = vmul.f32 %v1369, 1.442695
        %v1417 = vpow.pop %v1416
        %v1418 = vmul.f32 %v1372, 1.442695
        %v1419 = vpow.pop %v1418
        %v1420 = vmul.f32 %v1374, 1.442695
        %v1421 = vpow.pop %v1420
        %v1422 = vmul.f32 %v1377, 1.442695
        %v1423 = vpow.pop %v1422
        %v1424 = vmul.f32 %v1379, 1.442695
        %v1425 = vpow.pop %v1424
        %v1426 = vmul.f32 %v1382, 1.442695
        %v1427 = vpow.pop %v1426
        %v1428 = vmul.f32 %v1384, 1.442695
        %v1429 = vpow.pop %v1428
        %v1430 = vmul.f32 %v1387, 1.442695
        %v1431 = vpow.pop %v1430
        %v1432 = vmul.f32 %v1389, 1.442695
        %v1433 = vpow.pop %v1432
        %v1434 = vmul.f32 %v1392, 1.442695
        %v1435 = vpow.pop %v1434
        %v1436 = vmul.f32 %v1394, 1.442695
        %v1437 = vpow.pop %v1436
        %v1438 = vmul.f32 %v1397, 1.442695
        %v1439 = vpow.pop %v1438
        %v1440 = vmul.f32 %v1399, 1.442695
        %v1441 = vpow.pop %v1440
        %v1442 = vmul.f32 %v1402, 1.442695
        %v1443 = vpow.pop %v1442
        %v1444 = vmul.f32 %v1404, 1.442695
        %v1445 = vpow.pop %v1444
        %v1446 = vsel %vm1410, 16843009, 0
        %v1447 = vsel %vm1411, 16843009, 0
        %v1448 = vsel %vm1412, 16843009, 0
        %v1449 = vsel %vm1413, 16843009, 0
        %v1450 = vunpack.c.0.s8 %v1446
        %v1451 = vunpack.c.1.s8 %v1446
        %v1452 = vunpack.c.2.s8 %v1446
        %v1453 = vunpack.c.3.s8 %v1446
        %v1454 = vunpack.c.0.s8 %v1447
        %v1455 = vunpack.c.1.s8 %v1447
        %v1456 = vunpack.c.2.s8 %v1447
        %v1457 = vunpack.c.3.s8 %v1447
        %v1458 = vunpack.c.0.s8 %v1448
        %v1459 = vunpack.c.1.s8 %v1448
        %v1460 = vunpack.c.2.s8 %v1448
        %v1461 = vunpack.c.3.s8 %v1448
        %v1462 = vunpack.c.0.s8 %v1449
        %v1463 = vunpack.c.1.s8 %v1449
        %v1464 = vunpack.c.2.s8 %v1449
        %v1465 = vunpack.c.3.s8 %v1449
        %v1466 = vpack.c.b16 %v1450, %v1450
        %v1467 = vpack.c.b8 %v1466, %v1466
        %v1468 = vpack.c.b16 %v1451, %v1451
        %v1469 = vpack.c.b8 %v1468, %v1468
        %v1470 = vpack.c.b16 %v1452, %v1452
        %v1471 = vpack.c.b8 %v1470, %v1470
        %v1472 = vpack.c.b16 %v1453, %v1453
        %v1473 = vpack.c.b8 %v1472, %v1472
        %v1474 = vpack.c.b16 %v1454, %v1454
        %v1475 = vpack.c.b8 %v1474, %v1474
        %v1476 = vpack.c.b16 %v1455, %v1455
        %v1477 = vpack.c.b8 %v1476, %v1476
        %v1478 = vpack.c.b16 %v1456, %v1456
        %v1479 = vpack.c.b8 %v1478, %v1478
        %v1480 = vpack.c.b16 %v1457, %v1457
        %v1481 = vpack.c.b8 %v1480, %v1480
        %v1482 = vpack.c.b16 %v1458, %v1458
        %v1483 = vpack.c.b8 %v1482, %v1482
        %v1484 = vpack.c.b16 %v1459, %v1459
        %v1485 = vpack.c.b8 %v1484, %v1484
        %v1486 = vpack.c.b16 %v1460, %v1460
        %v1487 = vpack.c.b8 %v1486, %v1486
        %v1488 = vpack.c.b16 %v1461, %v1461
        %v1489 = vpack.c.b8 %v1488, %v1488
        %v1490 = vpack.c.b16 %v1462, %v1462
        %v1491 = vpack.c.b8 %v1490, %v1490
        %v1492 = vpack.c.b16 %v1463, %v1463
        %v1493 = vpack.c.b8 %v1492, %v1492
        %v1494 = vpack.c.b16 %v1464, %v1464
        %v1495 = vpack.c.b8 %v1494, %v1494
        %v1496 = vpack.c.b16 %v1465, %v1465
        %v1497 = vpack.c.b8 %v1496, %v1496
        %vm1498 = vnez %v1467
        %vm1499 = vnez %v1469
        %vm1500 = vnez %v1471
        %vm1501 = vnez %v1473
        %vm1502 = vnez %v1475
        %vm1503 = vnez %v1477
        %vm1504 = vnez %v1479
        %vm1505 = vnez %v1481
        %vm1506 = vnez %v1483
        %vm1507 = vnez %v1485
        %vm1508 = vnez %v1487
        %vm1509 = vnez %v1489
        %vm1510 = vnez %v1491
        %vm1511 = vnez %v1493
        %vm1512 = vnez %v1495
        %vm1513 = vnez %v1497
        %v1514 = vsel %vm1498, 16843009, 0
        %v1515 = vsel %vm1499, 16843009, 0
        %v1516 = vsel %vm1500, 16843009, 0
        %v1517 = vsel %vm1501, 16843009, 0
        %v1518 = vsel %vm1502, 16843009, 0
        %v1519 = vsel %vm1503, 16843009, 0
        %v1520 = vsel %vm1504, 16843009, 0
        %v1521 = vsel %vm1505, 16843009, 0
        %v1522 = vsel %vm1506, 16843009, 0
        %v1523 = vsel %vm1507, 16843009, 0
        %v1524 = vsel %vm1508, 16843009, 0
        %v1525 = vsel %vm1509, 16843009, 0
        %v1526 = vsel %vm1510, 16843009, 0
        %v1527 = vsel %vm1511, 16843009, 0
        %v1528 = vsel %vm1512, 16843009, 0
        %v1529 = vsel %vm1513, 16843009, 0
        %v1530 = vunpack.c.0.s8 %v1514
        %v1531 = vunpack.c.0.s8 %v1515
        %v1532 = vunpack.c.0.s8 %v1516
        %v1533 = vunpack.c.0.s8 %v1517
        %v1534 = vunpack.c.0.s8 %v1518
        %v1535 = vunpack.c.0.s8 %v1519
        %v1536 = vunpack.c.0.s8 %v1520
        %v1537 = vunpack.c.0.s8 %v1521
        %v1538 = vunpack.c.0.s8 %v1522
        %v1539 = vunpack.c.0.s8 %v1523
        %v1540 = vunpack.c.0.s8 %v1524
        %v1541 = vunpack.c.0.s8 %v1525
        %v1542 = vunpack.c.0.s8 %v1526
        %v1543 = vunpack.c.0.s8 %v1527
        %v1544 = vunpack.c.0.s8 %v1528
        %v1545 = vunpack.c.0.s8 %v1529
        %vm1546 = vcmp.ne.s32.totalorder %v1530, 0
        %vm1547 = vcmp.ne.s32.totalorder %v1531, 0
        %vm1548 = vcmp.ne.s32.totalorder %v1532, 0
        %vm1549 = vcmp.ne.s32.totalorder %v1533, 0
        %vm1550 = vcmp.ne.s32.totalorder %v1534, 0
        %vm1551 = vcmp.ne.s32.totalorder %v1535, 0
        %vm1552 = vcmp.ne.s32.totalorder %v1536, 0
        %vm1553 = vcmp.ne.s32.totalorder %v1537, 0
        %vm1554 = vcmp.ne.s32.totalorder %v1538, 0
        %vm1555 = vcmp.ne.s32.totalorder %v1539, 0
        %vm1556 = vcmp.ne.s32.totalorder %v1540, 0
        %vm1557 = vcmp.ne.s32.totalorder %v1541, 0
        %vm1558 = vcmp.ne.s32.totalorder %v1542, 0
        %vm1559 = vcmp.ne.s32.totalorder %v1543, 0
        %vm1560 = vcmp.ne.s32.totalorder %v1544, 0
        %vm1561 = vcmp.ne.s32.totalorder %v1545, 0
        %v1562 = vsel %vm1546, %v1415, 0.0
        %v1563 = vsel %vm1547, %v1417, 0.0
        %v1564 = vsel %vm1548, %v1419, 0.0
        %v1565 = vsel %vm1549, %v1421, 0.0
        %v1566 = vsel %vm1550, %v1423, 0.0
        %v1567 = vsel %vm1551, %v1425, 0.0
        %v1568 = vsel %vm1552, %v1427, 0.0
        %v1569 = vsel %vm1553, %v1429, 0.0
        %v1570 = vsel %vm1554, %v1431, 0.0
        %v1571 = vsel %vm1555, %v1433, 0.0
        %v1572 = vsel %vm1556, %v1435, 0.0
        %v1573 = vsel %vm1557, %v1437, 0.0
        %v1574 = vsel %vm1558, %v1439, 0.0
        %v1575 = vsel %vm1559, %v1441, 0.0
        %v1576 = vsel %vm1560, %v1443, 0.0
        %v1577 = vsel %vm1561, %v1445, 0.0
        %v1578 = vld [vmem:[#allocation3] sm:$0xff]
        %v1579 = vld [vmem:[#allocation3 + $0x8] sm:$0xff]
        %v1580 = vld [vmem:[#allocation3 + $0x10] sm:$0xff]
        %v1581 = vld [vmem:[#allocation3 + $0x18] sm:$0xff]
        %v1582 = vld [vmem:[#allocation3 + $0x20] sm:$0xff]
        %v1583 = vld [vmem:[#allocation3 + $0x28] sm:$0xff]
        %v1584 = vld [vmem:[#allocation3 + $0x30] sm:$0xff]
        %v1585 = vld [vmem:[#allocation3 + $0x38] sm:$0xff]
        %v1586 = vld [vmem:[#allocation3 + $0x40] sm:$0xff]
        %v1587 = vld [vmem:[#allocation3 + $0x48] sm:$0xff]
        %v1588 = vld [vmem:[#allocation3 + $0x50] sm:$0xff]
        %v1589 = vld [vmem:[#allocation3 + $0x58] sm:$0xff]
        %v1590 = vld [vmem:[#allocation3 + $0x60] sm:$0xff]
        %v1591 = vld [vmem:[#allocation3 + $0x68] sm:$0xff]
        %v1592 = vld [vmem:[#allocation3 + $0x70] sm:$0xff]
        %v1593 = vld [vmem:[#allocation3 + $0x78] sm:$0xff]
        %v1594 = vpack.c.bf16 %v1563, %v1562
        %v1595 = vpack.c.bf16 %v1565, %v1564
        %v1596 = vpack.c.bf16 %v1567, %v1566
        %v1597 = vpack.c.bf16 %v1569, %v1568
        %v1598 = vpack.c.bf16 %v1571, %v1570
        %v1599 = vpack.c.bf16 %v1573, %v1572
        %v1600 = vpack.c.bf16 %v1575, %v1574
        %v1601 = vpack.c.bf16 %v1577, %v1576
        %1602 = vmatpush.bf16.msra.mxu0 %v1348
        %1603 = vmatpush.bf16.msra.mxu0 %v1347
        %1604 = vmatpush.bf16.msra.mxu0 %v1346
        %1605 = vmatpush.bf16.msra.mxu0 %v1345
        %1606 = vmatpush.bf16.msra.mxu0 %v1344
        %1607 = vmatpush.bf16.msra.mxu0 %v1343
        %1608 = vmatpush.bf16.msra.mxu0 %v1342
        %1609 = vmatpush.bf16.msra.mxu0 %v1341
        %1610 = vmatmul.bf16.gmra.mxu0 %v1594
        %v1611 = vpop.f32.mrf.mxu0
        %v1612 = vadd.f32 0.0, %v1611
        %v1613 = vpop.f32.mrf.mxu0
        %v1614 = vadd.f32 0.0, %v1613
        %1615 = vmatmul.bf16.gmra.mxu0 %v1595
        %v1616 = vpop.f32.mrf.mxu0
        %v1617 = vadd.f32 0.0, %v1616
        %v1618 = vpop.f32.mrf.mxu0
        %v1619 = vadd.f32 0.0, %v1618
        %1620 = vmatmul.bf16.gmra.mxu0 %v1596
        %v1621 = vpop.f32.mrf.mxu0
        %v1622 = vadd.f32 0.0, %v1621
        %v1623 = vpop.f32.mrf.mxu0
        %v1624 = vadd.f32 0.0, %v1623
        %1625 = vmatmul.bf16.gmra.mxu0 %v1597
        %v1626 = vpop.f32.mrf.mxu0
        %v1627 = vadd.f32 0.0, %v1626
        %v1628 = vpop.f32.mrf.mxu0
        %v1629 = vadd.f32 0.0, %v1628
        %1630 = vmatmul.bf16.gmra.mxu0 %v1598
        %v1631 = vpop.f32.mrf.mxu0
        %v1632 = vadd.f32 0.0, %v1631
        %v1633 = vpop.f32.mrf.mxu0
        %v1634 = vadd.f32 0.0, %v1633
        %1635 = vmatmul.bf16.gmra.mxu0 %v1599
        %v1636 = vpop.f32.mrf.mxu0
        %v1637 = vadd.f32 0.0, %v1636
        %v1638 = vpop.f32.mrf.mxu0
        %v1639 = vadd.f32 0.0, %v1638
        %1640 = vmatmul.bf16.gmra.mxu0 %v1600
        %v1641 = vpop.f32.mrf.mxu0
        %v1642 = vadd.f32 0.0, %v1641
        %v1643 = vpop.f32.mrf.mxu0
        %v1644 = vadd.f32 0.0, %v1643
        %1645 = vmatmul.bf16.gmra.mxu0 %v1601
        %v1646 = vpop.f32.mrf.mxu0
        %v1647 = vadd.f32 0.0, %v1646
        %v1648 = vpop.f32.mrf.mxu0
        %v1649 = vadd.f32 0.0, %v1648
        %1650 = vdwg.mxu0
        %v1651 = vadd.f32 %v1578, %v1612
        %v1652 = vadd.f32 %v1579, %v1614
        %v1653 = vadd.f32 %v1580, %v1617
        %v1654 = vadd.f32 %v1581, %v1619
        %v1655 = vadd.f32 %v1582, %v1622
        %v1656 = vadd.f32 %v1583, %v1624
        %v1657 = vadd.f32 %v1584, %v1627
        %v1658 = vadd.f32 %v1585, %v1629
        %v1659 = vadd.f32 %v1586, %v1632
        %v1660 = vadd.f32 %v1587, %v1634
        %v1661 = vadd.f32 %v1588, %v1637
        %v1662 = vadd.f32 %v1589, %v1639
        %v1663 = vadd.f32 %v1590, %v1642
        %v1664 = vadd.f32 %v1591, %v1644
        %v1665 = vadd.f32 %v1592, %v1647
        %v1666 = vadd.f32 %v1593, %v1649
        %1667 = vst [vmem:[#allocation3] sm:$0xff] %v1651
        %1668 = vst [vmem:[#allocation3 + $0x8] sm:$0xff] %v1652
        %1669 = vst [vmem:[#allocation3 + $0x10] sm:$0xff] %v1653
        %1670 = vst [vmem:[#allocation3 + $0x18] sm:$0xff] %v1654
        %1671 = vst [vmem:[#allocation3 + $0x20] sm:$0xff] %v1655
        %1672 = vst [vmem:[#allocation3 + $0x28] sm:$0xff] %v1656
        %1673 = vst [vmem:[#allocation3 + $0x30] sm:$0xff] %v1657
        %1674 = vst [vmem:[#allocation3 + $0x38] sm:$0xff] %v1658
        %1675 = vst [vmem:[#allocation3 + $0x40] sm:$0xff] %v1659
        %1676 = vst [vmem:[#allocation3 + $0x48] sm:$0xff] %v1660
        %1677 = vst [vmem:[#allocation3 + $0x50] sm:$0xff] %v1661
        %1678 = vst [vmem:[#allocation3 + $0x58] sm:$0xff] %v1662
        %1679 = vst [vmem:[#allocation3 + $0x60] sm:$0xff] %v1663
        %1680 = vst [vmem:[#allocation3 + $0x68] sm:$0xff] %v1664
        %1681 = vst [vmem:[#allocation3 + $0x70] sm:$0xff] %v1665
        %1682 = vst [vmem:[#allocation3 + $0x78] sm:$0xff] %v1666
        %v1683 = vld [vmem:[#allocation4] sm:$0xff]
        %v1684 = vld [vmem:[#allocation4 + $0x8] sm:$0xff]
        %v1685 = vld [vmem:[#allocation4 + $0x10] sm:$0xff]
        %v1686 = vld [vmem:[#allocation4 + $0x18] sm:$0xff]
        %v1687 = vld [vmem:[#allocation4 + $0x20] sm:$0xff]
        %v1688 = vld [vmem:[#allocation4 + $0x28] sm:$0xff]
        %v1689 = vld [vmem:[#allocation4 + $0x30] sm:$0xff]
        %v1690 = vld [vmem:[#allocation4 + $0x38] sm:$0xff]
        %v1691 = vld [vmem:[#allocation4 + $0x40] sm:$0xff]
        %v1692 = vld [vmem:[#allocation4 + $0x48] sm:$0xff]
        %v1693 = vld [vmem:[#allocation4 + $0x50] sm:$0xff]
        %v1694 = vld [vmem:[#allocation4 + $0x58] sm:$0xff]
        %v1695 = vld [vmem:[#allocation4 + $0x60] sm:$0xff]
        %v1696 = vld [vmem:[#allocation4 + $0x68] sm:$0xff]
        %v1697 = vld [vmem:[#allocation4 + $0x70] sm:$0xff]
        %v1698 = vld [vmem:[#allocation4 + $0x78] sm:$0xff]
        %1699 = vadd.xlane.f32.xlu0 %v1562
        %v1700 = vpop.xlane.xlu0 %1699
        %1701 = vadd.xlane.f32.xlu0 %v1563
        %v1702 = vpop.xlane.xlu0 %1701
        %1703 = vadd.xlane.f32.xlu0 %v1564
        %v1704 = vpop.xlane.xlu0 %1703
        %1705 = vadd.xlane.f32.xlu0 %v1565
        %v1706 = vpop.xlane.xlu0 %1705
        %1707 = vadd.xlane.f32.xlu0 %v1566
        %v1708 = vpop.xlane.xlu0 %1707
        %1709 = vadd.xlane.f32.xlu0 %v1567
        %v1710 = vpop.xlane.xlu0 %1709
        %1711 = vadd.xlane.f32.xlu0 %v1568
        %v1712 = vpop.xlane.xlu0 %1711
        %1713 = vadd.xlane.f32.xlu0 %v1569
        %v1714 = vpop.xlane.xlu0 %1713
        %1715 = vadd.xlane.f32.xlu0 %v1570
        %v1716 = vpop.xlane.xlu0 %1715
        %1717 = vadd.xlane.f32.xlu0 %v1571
        %v1718 = vpop.xlane.xlu0 %1717
        %1719 = vadd.xlane.f32.xlu0 %v1572
        %v1720 = vpop.xlane.xlu0 %1719
        %1721 = vadd.xlane.f32.xlu0 %v1573
        %v1722 = vpop.xlane.xlu0 %1721
        %1723 = vadd.xlane.f32.xlu0 %v1574
        %v1724 = vpop.xlane.xlu0 %1723
        %1725 = vadd.xlane.f32.xlu0 %v1575
        %v1726 = vpop.xlane.xlu0 %1725
        %1727 = vadd.xlane.f32.xlu0 %v1576
        %v1728 = vpop.xlane.xlu0 %1727
        %1729 = vadd.xlane.f32.xlu0 %v1577
        %v1730 = vpop.xlane.xlu0 %1729
        %v1731 = vadd.f32 %v1683, %v1700
        %v1732 = vadd.f32 %v1684, %v1702
        %v1733 = vadd.f32 %v1685, %v1704
        %v1734 = vadd.f32 %v1686, %v1706
        %v1735 = vadd.f32 %v1687, %v1708
        %v1736 = vadd.f32 %v1688, %v1710
        %v1737 = vadd.f32 %v1689, %v1712
        %v1738 = vadd.f32 %v1690, %v1714
        %v1739 = vadd.f32 %v1691, %v1716
        %v1740 = vadd.f32 %v1692, %v1718
        %v1741 = vadd.f32 %v1693, %v1720
        %v1742 = vadd.f32 %v1694, %v1722
        %v1743 = vadd.f32 %v1695, %v1724
        %v1744 = vadd.f32 %v1696, %v1726
        %v1745 = vadd.f32 %v1697, %v1728
        %v1746 = vadd.f32 %v1698, %v1730
        %vm1747 = vcmask 7168
        %1748 = vst.msk [vmem:[#allocation4] sm:$0xff] %vm1747, %v1731
        %1749 = vst.msk [vmem:[#allocation4 + $0x8] sm:$0xff] %vm1747, %v1732
        %1750 = vst.msk [vmem:[#allocation4 + $0x10] sm:$0xff] %vm1747, %v1733
        %1751 = vst.msk [vmem:[#allocation4 + $0x18] sm:$0xff] %vm1747, %v1734
        %1752 = vst.msk [vmem:[#allocation4 + $0x20] sm:$0xff] %vm1747, %v1735
        %1753 = vst.msk [vmem:[#allocation4 + $0x28] sm:$0xff] %vm1747, %v1736
        %1754 = vst.msk [vmem:[#allocation4 + $0x30] sm:$0xff] %vm1747, %v1737
        %1755 = vst.msk [vmem:[#allocation4 + $0x38] sm:$0xff] %vm1747, %v1738
        %1756 = vst.msk [vmem:[#allocation4 + $0x40] sm:$0xff] %vm1747, %v1739
        %1757 = vst.msk [vmem:[#allocation4 + $0x48] sm:$0xff] %vm1747, %v1740
        %1758 = vst.msk [vmem:[#allocation4 + $0x50] sm:$0xff] %vm1747, %v1741
        %1759 = vst.msk [vmem:[#allocation4 + $0x58] sm:$0xff] %vm1747, %v1742
        %1760 = vst.msk [vmem:[#allocation4 + $0x60] sm:$0xff] %vm1747, %v1743
        %1761 = vst.msk [vmem:[#allocation4 + $0x68] sm:$0xff] %vm1747, %v1744
        %1762 = vst.msk [vmem:[#allocation4 + $0x70] sm:$0xff] %vm1747, %v1745
        %1763 = vst.msk [vmem:[#allocation4 + $0x78] sm:$0xff] %vm1747, %v1746
        %p1764 = scmp.eq.s32.totalorder %s36, 1
        %p1765 = scmp.eq.s32.totalorder %s37, 2
        %p1766 = pnand %p1764, %p1765
        %p1767 = pneg %p1766
        // Predicated region
        $region69: #{tpu_custom_call.1} parent=47 // pred_check
          _
        $region70: #{tpu_custom_call.1} parent=47 // pred_check_branch
          %1769 = sbr.rel (%p1766) target = $region72
        $region71: #{tpu_custom_call.1} parent=47 // pred_region
          %v1770 = vld [vmem:[#allocation3] sm:$0xff]
          %v1771 = vld [vmem:[#allocation3 + $0x8] sm:$0xff]
          %v1772 = vld [vmem:[#allocation3 + $0x10] sm:$0xff]
          %v1773 = vld [vmem:[#allocation3 + $0x18] sm:$0xff]
          %v1774 = vld [vmem:[#allocation3 + $0x20] sm:$0xff]
          %v1775 = vld [vmem:[#allocation3 + $0x28] sm:$0xff]
          %v1776 = vld [vmem:[#allocation3 + $0x30] sm:$0xff]
          %v1777 = vld [vmem:[#allocation3 + $0x38] sm:$0xff]
          %v1778 = vld [vmem:[#allocation3 + $0x40] sm:$0xff]
          %v1779 = vld [vmem:[#allocation3 + $0x48] sm:$0xff]
          %v1780 = vld [vmem:[#allocation3 + $0x50] sm:$0xff]
          %v1781 = vld [vmem:[#allocation3 + $0x58] sm:$0xff]
          %v1782 = vld [vmem:[#allocation3 + $0x60] sm:$0xff]
          %v1783 = vld [vmem:[#allocation3 + $0x68] sm:$0xff]
          %v1784 = vld [vmem:[#allocation3 + $0x70] sm:$0xff]
          %v1785 = vld [vmem:[#allocation3 + $0x78] sm:$0xff]
          %v1786 = vld [vmem:[#allocation4] sm:$0xff]
          %v1787 = vld [vmem:[#allocation4 + $0x8] sm:$0xff]
          %v1788 = vld [vmem:[#allocation4 + $0x10] sm:$0xff]
          %v1789 = vld [vmem:[#allocation4 + $0x18] sm:$0xff]
          %v1790 = vld [vmem:[#allocation4 + $0x20] sm:$0xff]
          %v1791 = vld [vmem:[#allocation4 + $0x28] sm:$0xff]
          %v1792 = vld [vmem:[#allocation4 + $0x30] sm:$0xff]
          %v1793 = vld [vmem:[#allocation4 + $0x38] sm:$0xff]
          %v1794 = vld [vmem:[#allocation4 + $0x40] sm:$0xff]
          %v1795 = vld [vmem:[#allocation4 + $0x48] sm:$0xff]
          %v1796 = vld [vmem:[#allocation4 + $0x50] sm:$0xff]
          %v1797 = vld [vmem:[#allocation4 + $0x58] sm:$0xff]
          %v1798 = vld [vmem:[#allocation4 + $0x60] sm:$0xff]
          %v1799 = vld [vmem:[#allocation4 + $0x68] sm:$0xff]
          %v1800 = vld [vmem:[#allocation4 + $0x70] sm:$0xff]
          %v1801 = vld [vmem:[#allocation4 + $0x78] sm:$0xff]
          %v1802 = vrcp.pop %v1786
          %v1803 = vrcp.pop %v1787
          %v1804 = vrcp.pop %v1788
          %v1805 = vrcp.pop %v1789
          %v1806 = vrcp.pop %v1790
          %v1807 = vrcp.pop %v1791
          %v1808 = vrcp.pop %v1792
          %v1809 = vrcp.pop %v1793
          %v1810 = vrcp.pop %v1794
          %v1811 = vrcp.pop %v1795
          %v1812 = vrcp.pop %v1796
          %v1813 = vrcp.pop %v1797
          %v1814 = vrcp.pop %v1798
          %v1815 = vrcp.pop %v1799
          %v1816 = vrcp.pop %v1800
          %v1817 = vrcp.pop %v1801
          %vm1818 = vcmp.gt.f32.partialorder %v1786, 0.0
          %vm1819 = vcmp.gt.f32.partialorder %v1787, 0.0
          %vm1820 = vcmp.gt.f32.partialorder %v1788, 0.0
          %vm1821 = vcmp.gt.f32.partialorder %v1789, 0.0
          %vm1822 = vcmp.gt.f32.partialorder %v1790, 0.0
          %vm1823 = vcmp.gt.f32.partialorder %v1791, 0.0
          %vm1824 = vcmp.gt.f32.partialorder %v1792, 0.0
          %vm1825 = vcmp.gt.f32.partialorder %v1793, 0.0
          %vm1826 = vcmp.gt.f32.partialorder %v1794, 0.0
          %vm1827 = vcmp.gt.f32.partialorder %v1795, 0.0
          %vm1828 = vcmp.gt.f32.partialorder %v1796, 0.0
          %vm1829 = vcmp.gt.f32.partialorder %v1797, 0.0
          %vm1830 = vcmp.gt.f32.partialorder %v1798, 0.0
          %vm1831 = vcmp.gt.f32.partialorder %v1799, 0.0
          %vm1832 = vcmp.gt.f32.partialorder %v1800, 0.0
          %vm1833 = vcmp.gt.f32.partialorder %v1801, 0.0
          %1835 = vset.pattern.permute.xlu0 0
          %1836 = vperm.xlu0 %1835, %v1802
          %v1837 = vpop.permute.xlu0 %1836
          %1840 = vset.pattern.permute.xlu0 0
          %1841 = vperm.xlu0 %1840, %v1803
          %v1842 = vpop.permute.xlu0 %1841
          %1845 = vset.pattern.permute.xlu0 0
          %1846 = vperm.xlu0 %1845, %v1804
          %v1847 = vpop.permute.xlu0 %1846
          %1850 = vset.pattern.permute.xlu0 0
          %1851 = vperm.xlu0 %1850, %v1805
          %v1852 = vpop.permute.xlu0 %1851
          %1855 = vset.pattern.permute.xlu0 0
          %1856 = vperm.xlu0 %1855, %v1806
          %v1857 = vpop.permute.xlu0 %1856
          %1860 = vset.pattern.permute.xlu0 0
          %1861 = vperm.xlu0 %1860, %v1807
          %v1862 = vpop.permute.xlu0 %1861
          %1865 = vset.pattern.permute.xlu0 0
          %1866 = vperm.xlu0 %1865, %v1808
          %v1867 = vpop.permute.xlu0 %1866
          %1870 = vset.pattern.permute.xlu0 0
          %1871 = vperm.xlu0 %1870, %v1809
          %v1872 = vpop.permute.xlu0 %1871
          %1875 = vset.pattern.permute.xlu0 0
          %1876 = vperm.xlu0 %1875, %v1810
          %v1877 = vpop.permute.xlu0 %1876
          %1880 = vset.pattern.permute.xlu0 0
          %1881 = vperm.xlu0 %1880, %v1811
          %v1882 = vpop.permute.xlu0 %1881
          %1885 = vset.pattern.permute.xlu0 0
          %1886 = vperm.xlu0 %1885, %v1812
          %v1887 = vpop.permute.xlu0 %1886
          %1890 = vset.pattern.permute.xlu0 0
          %1891 = vperm.xlu0 %1890, %v1813
          %v1892 = vpop.permute.xlu0 %1891
          %1895 = vset.pattern.permute.xlu0 0
          %1896 = vperm.xlu0 %1895, %v1814
          %v1897 = vpop.permute.xlu0 %1896
          %1900 = vset.pattern.permute.xlu0 0
          %1901 = vperm.xlu0 %1900, %v1815
          %v1902 = vpop.permute.xlu0 %1901
          %1905 = vset.pattern.permute.xlu0 0
          %1906 = vperm.xlu0 %1905, %v1816
          %v1907 = vpop.permute.xlu0 %1906
          %1910 = vset.pattern.permute.xlu0 0
          %1911 = vperm.xlu0 %1910, %v1817
          %v1912 = vpop.permute.xlu0 %1911
          %v1914 = vmul.f32 %v1770, %v1837
          %v1915 = vmul.f32 %v1771, %v1842
          %v1916 = vmul.f32 %v1772, %v1847
          %v1917 = vmul.f32 %v1773, %v1852
          %v1918 = vmul.f32 %v1774, %v1857
          %v1919 = vmul.f32 %v1775, %v1862
          %v1920 = vmul.f32 %v1776, %v1867
          %v1921 = vmul.f32 %v1777, %v1872
          %v1922 = vmul.f32 %v1778, %v1877
          %v1923 = vmul.f32 %v1779, %v1882
          %v1924 = vmul.f32 %v1780, %v1887
          %v1925 = vmul.f32 %v1781, %v1892
          %v1926 = vmul.f32 %v1782, %v1897
          %v1927 = vmul.f32 %v1783, %v1902
          %v1928 = vmul.f32 %v1784, %v1907
          %v1929 = vmul.f32 %v1785, %v1912
          %v1930 = vsel %vm1818, 1, 0
          %v1931 = vsel %vm1819, 1, 0
          %v1932 = vsel %vm1820, 1, 0
          %v1933 = vsel %vm1821, 1, 0
          %v1934 = vsel %vm1822, 1, 0
          %v1935 = vsel %vm1823, 1, 0
          %v1936 = vsel %vm1824, 1, 0
          %v1937 = vsel %vm1825, 1, 0
          %v1938 = vsel %vm1826, 1, 0
          %v1939 = vsel %vm1827, 1, 0
          %v1940 = vsel %vm1828, 1, 0
          %v1941 = vsel %vm1829, 1, 0
          %v1942 = vsel %vm1830, 1, 0
          %v1943 = vsel %vm1831, 1, 0
          %v1944 = vsel %vm1832, 1, 0
          %v1945 = vsel %vm1833, 1, 0
          %1946 = vset.pattern.permute.xlu0 0
          %1947 = vperm.xlu0 %1946, %v1930
          %v1948 = vpop.permute.xlu0 %1947
          %1949 = vset.pattern.permute.xlu0 0
          %1950 = vperm.xlu0 %1949, %v1931
          %v1951 = vpop.permute.xlu0 %1950
          %1952 = vset.pattern.permute.xlu0 0
          %1953 = vperm.xlu0 %1952, %v1932
          %v1954 = vpop.permute.xlu0 %1953
          %1955 = vset.pattern.permute.xlu0 0
          %1956 = vperm.xlu0 %1955, %v1933
          %v1957 = vpop.permute.xlu0 %1956
          %1958 = vset.pattern.permute.xlu0 0
          %1959 = vperm.xlu0 %1958, %v1934
          %v1960 = vpop.permute.xlu0 %1959
          %1961 = vset.pattern.permute.xlu0 0
          %1962 = vperm.xlu0 %1961, %v1935
          %v1963 = vpop.permute.xlu0 %1962
          %1964 = vset.pattern.permute.xlu0 0
          %1965 = vperm.xlu0 %1964, %v1936
          %v1966 = vpop.permute.xlu0 %1965
          %1967 = vset.pattern.permute.xlu0 0
          %1968 = vperm.xlu0 %1967, %v1937
          %v1969 = vpop.permute.xlu0 %1968
          %1970 = vset.pattern.permute.xlu0 0
          %1971 = vperm.xlu0 %1970, %v1938
          %v1972 = vpop.permute.xlu0 %1971
          %1973 = vset.pattern.permute.xlu0 0
          %1974 = vperm.xlu0 %1973, %v1939
          %v1975 = vpop.permute.xlu0 %1974
          %1976 = vset.pattern.permute.xlu0 0
          %1977 = vperm.xlu0 %1976, %v1940
          %v1978 = vpop.permute.xlu0 %1977
          %1979 = vset.pattern.permute.xlu0 0
          %1980 = vperm.xlu0 %1979, %v1941
          %v1981 = vpop.permute.xlu0 %1980
          %1982 = vset.pattern.permute.xlu0 0
          %1983 = vperm.xlu0 %1982, %v1942
          %v1984 = vpop.permute.xlu0 %1983
          %1985 = vset.pattern.permute.xlu0 0
          %1986 = vperm.xlu0 %1985, %v1943
          %v1987 = vpop.permute.xlu0 %1986
          %1988 = vset.pattern.permute.xlu0 0
          %1989 = vperm.xlu0 %1988, %v1944
          %v1990 = vpop.permute.xlu0 %1989
          %1991 = vset.pattern.permute.xlu0 0
          %1992 = vperm.xlu0 %1991, %v1945
          %v1993 = vpop.permute.xlu0 %1992
          %vm1994 = vcmp.eq.s32.totalorder %v1948, 1
          %vm1995 = vcmp.eq.s32.totalorder %v1951, 1
          %vm1996 = vcmp.eq.s32.totalorder %v1954, 1
          %vm1997 = vcmp.eq.s32.totalorder %v1957, 1
          %vm1998 = vcmp.eq.s32.totalorder %v1960, 1
          %vm1999 = vcmp.eq.s32.totalorder %v1963, 1
          %vm2000 = vcmp.eq.s32.totalorder %v1966, 1
          %vm2001 = vcmp.eq.s32.totalorder %v1969, 1
          %vm2002 = vcmp.eq.s32.totalorder %v1972, 1
          %vm2003 = vcmp.eq.s32.totalorder %v1975, 1
          %vm2004 = vcmp.eq.s32.totalorder %v1978, 1
          %vm2005 = vcmp.eq.s32.totalorder %v1981, 1
          %vm2006 = vcmp.eq.s32.totalorder %v1984, 1
          %vm2007 = vcmp.eq.s32.totalorder %v1987, 1
          %vm2008 = vcmp.eq.s32.totalorder %v1990, 1
          %vm2009 = vcmp.eq.s32.totalorder %v1993, 1
          %v2010 = vsel %vm1994, %v1914, 0.0
          %v2011 = vsel %vm1995, %v1915, 0.0
          %v2012 = vsel %vm1996, %v1916, 0.0
          %v2013 = vsel %vm1997, %v1917, 0.0
          %v2014 = vsel %vm1998, %v1918, 0.0
          %v2015 = vsel %vm1999, %v1919, 0.0
          %v2016 = vsel %vm2000, %v1920, 0.0
          %v2017 = vsel %vm2001, %v1921, 0.0
          %v2018 = vsel %vm2002, %v1922, 0.0
          %v2019 = vsel %vm2003, %v1923, 0.0
          %v2020 = vsel %vm2004, %v1924, 0.0
          %v2021 = vsel %vm2005, %v1925, 0.0
          %v2022 = vsel %vm2006, %v1926, 0.0
          %v2023 = vsel %vm2007, %v1927, 0.0
          %v2024 = vsel %vm2008, %v1928, 0.0
          %v2025 = vsel %vm2009, %v1929, 0.0
          %v2026 = vmax.f32 %v2010, 0.0
          %v2027 = vmax.f32 %v2011, 0.0
          %v2028 = vmax.f32 %v2012, 0.0
          %v2029 = vmax.f32 %v2013, 0.0
          %v2030 = vmax.f32 %v2014, 0.0
          %v2031 = vmax.f32 %v2015, 0.0
          %v2032 = vmax.f32 %v2016, 0.0
          %v2033 = vmax.f32 %v2017, 0.0
          %v2034 = vmax.f32 %v2018, 0.0
          %v2035 = vmax.f32 %v2019, 0.0
          %v2036 = vmax.f32 %v2020, 0.0
          %v2037 = vmax.f32 %v2021, 0.0
          %v2038 = vmax.f32 %v2022, 0.0
          %v2039 = vmax.f32 %v2023, 0.0
          %v2040 = vmax.f32 %v2024, 0.0
          %v2041 = vmax.f32 %v2025, 0.0
          %2042 = vadd.xlane.f32.xlu0 %v2026
          %v2043 = vpop.xlane.xlu0 %2042
          %2044 = vadd.xlane.f32.xlu0 %v2027
          %v2045 = vpop.xlane.xlu0 %2044
          %2046 = vadd.xlane.f32.xlu0 %v2028
          %v2047 = vpop.xlane.xlu0 %2046
          %2048 = vadd.xlane.f32.xlu0 %v2029
          %v2049 = vpop.xlane.xlu0 %2048
          %2050 = vadd.xlane.f32.xlu0 %v2030
          %v2051 = vpop.xlane.xlu0 %2050
          %2052 = vadd.xlane.f32.xlu0 %v2031
          %v2053 = vpop.xlane.xlu0 %2052
          %2054 = vadd.xlane.f32.xlu0 %v2032
          %v2055 = vpop.xlane.xlu0 %2054
          %2056 = vadd.xlane.f32.xlu0 %v2033
          %v2057 = vpop.xlane.xlu0 %2056
          %2058 = vadd.xlane.f32.xlu0 %v2034
          %v2059 = vpop.xlane.xlu0 %2058
          %2060 = vadd.xlane.f32.xlu0 %v2035
          %v2061 = vpop.xlane.xlu0 %2060
          %2062 = vadd.xlane.f32.xlu0 %v2036
          %v2063 = vpop.xlane.xlu0 %2062
          %2064 = vadd.xlane.f32.xlu0 %v2037
          %v2065 = vpop.xlane.xlu0 %2064
          %2066 = vadd.xlane.f32.xlu0 %v2038
          %v2067 = vpop.xlane.xlu0 %2066
          %2068 = vadd.xlane.f32.xlu0 %v2039
          %v2069 = vpop.xlane.xlu0 %2068
          %2070 = vadd.xlane.f32.xlu0 %v2040
          %v2071 = vpop.xlane.xlu0 %2070
          %2072 = vadd.xlane.f32.xlu0 %v2041
          %v2073 = vpop.xlane.xlu0 %2072
          %v2074 = vrcp.pop 128.0
          %v2075 = vmul.f32 128.0, %v2074
          %v2076 = vsub.f32 1.0, %v2075
          %v2077 = vmul.f32 %v2074, %v2076
          %v2078 = vadd.f32 %v2074, %v2077
          %vm2079 = vweird.f32 %v2074
          %v2080 = vsel %vm2079, %v2074, %v2078
          %v2081 = vmul.f32 %v2043, %v2080
          %v2082 = vmul.f32 %v2045, %v2080
          %v2083 = vmul.f32 %v2047, %v2080
          %v2084 = vmul.f32 %v2049, %v2080
          %v2085 = vmul.f32 %v2051, %v2080
          %v2086 = vmul.f32 %v2053, %v2080
          %v2087 = vmul.f32 %v2055, %v2080
          %v2088 = vmul.f32 %v2057, %v2080
          %v2089 = vmul.f32 %v2059, %v2080
          %v2090 = vmul.f32 %v2061, %v2080
          %v2091 = vmul.f32 %v2063, %v2080
          %v2092 = vmul.f32 %v2065, %v2080
          %v2093 = vmul.f32 %v2067, %v2080
          %v2094 = vmul.f32 %v2069, %v2080
          %v2095 = vmul.f32 %v2071, %v2080
          %v2096 = vmul.f32 %v2073, %v2080
          %v2097 = vsub.f32 %v2026, %v2081
          %v2098 = vsub.f32 %v2027, %v2082
          %v2099 = vsub.f32 %v2028, %v2083
          %v2100 = vsub.f32 %v2029, %v2084
          %v2101 = vsub.f32 %v2030, %v2085
          %v2102 = vsub.f32 %v2031, %v2086
          %v2103 = vsub.f32 %v2032, %v2087
          %v2104 = vsub.f32 %v2033, %v2088
          %v2105 = vsub.f32 %v2034, %v2089
          %v2106 = vsub.f32 %v2035, %v2090
          %v2107 = vsub.f32 %v2036, %v2091
          %v2108 = vsub.f32 %v2037, %v2092
          %v2109 = vsub.f32 %v2038, %v2093
          %v2110 = vsub.f32 %v2039, %v2094
          %v2111 = vsub.f32 %v2040, %v2095
          %v2112 = vsub.f32 %v2041, %v2096
          %v2113 = vmul.f32 %v2097, %v2097
          %v2114 = vmul.f32 %v2098, %v2098
          %v2115 = vmul.f32 %v2099, %v2099
          %v2116 = vmul.f32 %v2100, %v2100
          %v2117 = vmul.f32 %v2101, %v2101
          %v2118 = vmul.f32 %v2102, %v2102
          %v2119 = vmul.f32 %v2103, %v2103
          %v2120 = vmul.f32 %v2104, %v2104
          %v2121 = vmul.f32 %v2105, %v2105
          %v2122 = vmul.f32 %v2106, %v2106
          %v2123 = vmul.f32 %v2107, %v2107
          %v2124 = vmul.f32 %v2108, %v2108
          %v2125 = vmul.f32 %v2109, %v2109
          %v2126 = vmul.f32 %v2110, %v2110
          %v2127 = vmul.f32 %v2111, %v2111
          %v2128 = vmul.f32 %v2112, %v2112
          %2129 = vadd.xlane.f32.xlu0 %v2113
          %v2130 = vpop.xlane.xlu0 %2129
          %2131 = vadd.xlane.f32.xlu0 %v2114
          %v2132 = vpop.xlane.xlu0 %2131
          %2133 = vadd.xlane.f32.xlu0 %v2115
          %v2134 = vpop.xlane.xlu0 %2133
          %2135 = vadd.xlane.f32.xlu0 %v2116
          %v2136 = vpop.xlane.xlu0 %2135
          %2137 = vadd.xlane.f32.xlu0 %v2117
          %v2138 = vpop.xlane.xlu0 %2137
          %2139 = vadd.xlane.f32.xlu0 %v2118
          %v2140 = vpop.xlane.xlu0 %2139
          %2141 = vadd.xlane.f32.xlu0 %v2119
          %v2142 = vpop.xlane.xlu0 %2141
          %2143 = vadd.xlane.f32.xlu0 %v2120
          %v2144 = vpop.xlane.xlu0 %2143
          %2145 = vadd.xlane.f32.xlu0 %v2121
          %v2146 = vpop.xlane.xlu0 %2145
          %2147 = vadd.xlane.f32.xlu0 %v2122
          %v2148 = vpop.xlane.xlu0 %2147
          %2149 = vadd.xlane.f32.xlu0 %v2123
          %v2150 = vpop.xlane.xlu0 %2149
          %2151 = vadd.xlane.f32.xlu0 %v2124
          %v2152 = vpop.xlane.xlu0 %2151
          %2153 = vadd.xlane.f32.xlu0 %v2125
          %v2154 = vpop.xlane.xlu0 %2153
          %2155 = vadd.xlane.f32.xlu0 %v2126
          %v2156 = vpop.xlane.xlu0 %2155
          %2157 = vadd.xlane.f32.xlu0 %v2127
          %v2158 = vpop.xlane.xlu0 %2157
          %2159 = vadd.xlane.f32.xlu0 %v2128
          %v2160 = vpop.xlane.xlu0 %2159
          %v2161 = vmul.f32 %v2130, %v2080
          %v2162 = vmul.f32 %v2132, %v2080
          %v2163 = vmul.f32 %v2134, %v2080
          %v2164 = vmul.f32 %v2136, %v2080
          %v2165 = vmul.f32 %v2138, %v2080
          %v2166 = vmul.f32 %v2140, %v2080
          %v2167 = vmul.f32 %v2142, %v2080
          %v2168 = vmul.f32 %v2144, %v2080
          %v2169 = vmul.f32 %v2146, %v2080
          %v2170 = vmul.f32 %v2148, %v2080
          %v2171 = vmul.f32 %v2150, %v2080
          %v2172 = vmul.f32 %v2152, %v2080
          %v2173 = vmul.f32 %v2154, %v2080
          %v2174 = vmul.f32 %v2156, %v2080
          %v2175 = vmul.f32 %v2158, %v2080
          %v2176 = vmul.f32 %v2160, %v2080
          %v2177 = vadd.f32 %v2161, 1e-05
          %v2178 = vadd.f32 %v2162, 1e-05
          %v2179 = vadd.f32 %v2163, 1e-05
          %v2180 = vadd.f32 %v2164, 1e-05
          %v2181 = vadd.f32 %v2165, 1e-05
          %v2182 = vadd.f32 %v2166, 1e-05
          %v2183 = vadd.f32 %v2167, 1e-05
          %v2184 = vadd.f32 %v2168, 1e-05
          %v2185 = vadd.f32 %v2169, 1e-05
          %v2186 = vadd.f32 %v2170, 1e-05
          %v2187 = vadd.f32 %v2171, 1e-05
          %v2188 = vadd.f32 %v2172, 1e-05
          %v2189 = vadd.f32 %v2173, 1e-05
          %v2190 = vadd.f32 %v2174, 1e-05
          %v2191 = vadd.f32 %v2175, 1e-05
          %v2192 = vadd.f32 %v2176, 1e-05
          %v2193 = vrsqrt.pop %v2177
          %v2194 = vmul.f32 %v2193, %v2177
          %v2195 = vmul.f32 %v2194, %v2193
          %v2196 = vmul.f32 0.5, %v2195
          %v2197 = vsub.f32 1.5, %v2196
          %v2198 = vmul.f32 %v2193, %v2197
          %vm2199 = vweird.f32 %v2177
          %vm2200 = vweird.f32 %v2193
          %vm2201 = vmor %vm2199, %vm2200
          %v2202 = vsel %vm2201, %v2193, %v2198
          %v2203 = vrsqrt.pop %v2178
          %v2204 = vmul.f32 %v2203, %v2178
          %v2205 = vmul.f32 %v2204, %v2203
          %v2206 = vmul.f32 0.5, %v2205
          %v2207 = vsub.f32 1.5, %v2206
          %v2208 = vmul.f32 %v2203, %v2207
          %vm2209 = vweird.f32 %v2178
          %vm2210 = vweird.f32 %v2203
          %vm2211 = vmor %vm2209, %vm2210
          %v2212 = vsel %vm2211, %v2203, %v2208
          %v2213 = vrsqrt.pop %v2179
          %v2214 = vmul.f32 %v2213, %v2179
          %v2215 = vmul.f32 %v2214, %v2213
          %v2216 = vmul.f32 0.5, %v2215
          %v2217 = vsub.f32 1.5, %v2216
          %v2218 = vmul.f32 %v2213, %v2217
          %vm2219 = vweird.f32 %v2179
          %vm2220 = vweird.f32 %v2213
          %vm2221 = vmor %vm2219, %vm2220
          %v2222 = vsel %vm2221, %v2213, %v2218
          %v2223 = vrsqrt.pop %v2180
          %v2224 = vmul.f32 %v2223, %v2180
          %v2225 = vmul.f32 %v2224, %v2223
          %v2226 = vmul.f32 0.5, %v2225
          %v2227 = vsub.f32 1.5, %v2226
          %v2228 = vmul.f32 %v2223, %v2227
          %vm2229 = vweird.f32 %v2180
          %vm2230 = vweird.f32 %v2223
          %vm2231 = vmor %vm2229, %vm2230
          %v2232 = vsel %vm2231, %v2223, %v2228
          %v2233 = vrsqrt.pop %v2181
          %v2234 = vmul.f32 %v2233, %v2181
          %v2235 = vmul.f32 %v2234, %v2233
          %v2236 = vmul.f32 0.5, %v2235
          %v2237 = vsub.f32 1.5, %v2236
          %v2238 = vmul.f32 %v2233, %v2237
          %vm2239 = vweird.f32 %v2181
          %vm2240 = vweird.f32 %v2233
          %vm2241 = vmor %vm2239, %vm2240
          %v2242 = vsel %vm2241, %v2233, %v2238
          %v2243 = vrsqrt.pop %v2182
          %v2244 = vmul.f32 %v2243, %v2182
          %v2245 = vmul.f32 %v2244, %v2243
          %v2246 = vmul.f32 0.5, %v2245
          %v2247 = vsub.f32 1.5, %v2246
          %v2248 = vmul.f32 %v2243, %v2247
          %vm2249 = vweird.f32 %v2182
          %vm2250 = vweird.f32 %v2243
          %vm2251 = vmor %vm2249, %vm2250
          %v2252 = vsel %vm2251, %v2243, %v2248
          %v2253 = vrsqrt.pop %v2183
          %v2254 = vmul.f32 %v2253, %v2183
          %v2255 = vmul.f32 %v2254, %v2253
          %v2256 = vmul.f32 0.5, %v2255
          %v2257 = vsub.f32 1.5, %v2256
          %v2258 = vmul.f32 %v2253, %v2257
          %vm2259 = vweird.f32 %v2183
          %vm2260 = vweird.f32 %v2253
          %vm2261 = vmor %vm2259, %vm2260
          %v2262 = vsel %vm2261, %v2253, %v2258
          %v2263 = vrsqrt.pop %v2184
          %v2264 = vmul.f32 %v2263, %v2184
          %v2265 = vmul.f32 %v2264, %v2263
          %v2266 = vmul.f32 0.5, %v2265
          %v2267 = vsub.f32 1.5, %v2266
          %v2268 = vmul.f32 %v2263, %v2267
          %vm2269 = vweird.f32 %v2184
          %vm2270 = vweird.f32 %v2263
          %vm2271 = vmor %vm2269, %vm2270
          %v2272 = vsel %vm2271, %v2263, %v2268
          %v2273 = vrsqrt.pop %v2185
          %v2274 = vmul.f32 %v2273, %v2185
          %v2275 = vmul.f32 %v2274, %v2273
          %v2276 = vmul.f32 0.5, %v2275
          %v2277 = vsub.f32 1.5, %v2276
          %v2278 = vmul.f32 %v2273, %v2277
          %vm2279 = vweird.f32 %v2185
          %vm2280 = vweird.f32 %v2273
          %vm2281 = vmor %vm2279, %vm2280
          %v2282 = vsel %vm2281, %v2273, %v2278
          %v2283 = vrsqrt.pop %v2186
          %v2284 = vmul.f32 %v2283, %v2186
          %v2285 = vmul.f32 %v2284, %v2283
          %v2286 = vmul.f32 0.5, %v2285
          %v2287 = vsub.f32 1.5, %v2286
          %v2288 = vmul.f32 %v2283, %v2287
          %vm2289 = vweird.f32 %v2186
          %vm2290 = vweird.f32 %v2283
          %vm2291 = vmor %vm2289, %vm2290
          %v2292 = vsel %vm2291, %v2283, %v2288
          %v2293 = vrsqrt.pop %v2187
          %v2294 = vmul.f32 %v2293, %v2187
          %v2295 = vmul.f32 %v2294, %v2293
          %v2296 = vmul.f32 0.5, %v2295
          %v2297 = vsub.f32 1.5, %v2296
          %v2298 = vmul.f32 %v2293, %v2297
          %vm2299 = vweird.f32 %v2187
          %vm2300 = vweird.f32 %v2293
          %vm2301 = vmor %vm2299, %vm2300
          %v2302 = vsel %vm2301, %v2293, %v2298
          %v2303 = vrsqrt.pop %v2188
          %v2304 = vmul.f32 %v2303, %v2188
          %v2305 = vmul.f32 %v2304, %v2303
          %v2306 = vmul.f32 0.5, %v2305
          %v2307 = vsub.f32 1.5, %v2306
          %v2308 = vmul.f32 %v2303, %v2307
          %vm2309 = vweird.f32 %v2188
          %vm2310 = vweird.f32 %v2303
          %vm2311 = vmor %vm2309, %vm2310
          %v2312 = vsel %vm2311, %v2303, %v2308
          %v2313 = vrsqrt.pop %v2189
          %v2314 = vmul.f32 %v2313, %v2189
          %v2315 = vmul.f32 %v2314, %v2313
          %v2316 = vmul.f32 0.5, %v2315
          %v2317 = vsub.f32 1.5, %v2316
          %v2318 = vmul.f32 %v2313, %v2317
          %vm2319 = vweird.f32 %v2189
          %vm2320 = vweird.f32 %v2313
          %vm2321 = vmor %vm2319, %vm2320
          %v2322 = vsel %vm2321, %v2313, %v2318
          %v2323 = vrsqrt.pop %v2190
          %v2324 = vmul.f32 %v2323, %v2190
          %v2325 = vmul.f32 %v2324, %v2323
          %v2326 = vmul.f32 0.5, %v2325
          %v2327 = vsub.f32 1.5, %v2326
          %v2328 = vmul.f32 %v2323, %v2327
          %vm2329 = vweird.f32 %v2190
          %vm2330 = vweird.f32 %v2323
          %vm2331 = vmor %vm2329, %vm2330
          %v2332 = vsel %vm2331, %v2323, %v2328
          %v2333 = vrsqrt.pop %v2191
          %v2334 = vmul.f32 %v2333, %v2191
          %v2335 = vmul.f32 %v2334, %v2333
          %v2336 = vmul.f32 0.5, %v2335
          %v2337 = vsub.f32 1.5, %v2336
          %v2338 = vmul.f32 %v2333, %v2337
          %vm2339 = vweird.f32 %v2191
          %vm2340 = vweird.f32 %v2333
          %vm2341 = vmor %vm2339, %vm2340
          %v2342 = vsel %vm2341, %v2333, %v2338
          %v2343 = vrsqrt.pop %v2192
          %v2344 = vmul.f32 %v2343, %v2192
          %v2345 = vmul.f32 %v2344, %v2343
          %v2346 = vmul.f32 0.5, %v2345
          %v2347 = vsub.f32 1.5, %v2346
          %v2348 = vmul.f32 %v2343, %v2347
          %vm2349 = vweird.f32 %v2192
          %vm2350 = vweird.f32 %v2343
          %vm2351 = vmor %vm2349, %vm2350
          %v2352 = vsel %vm2351, %v2343, %v2348
          %v2353 = vmul.f32 %v2097, %v2202
          %v2354 = vmul.f32 %v2098, %v2212
          %v2355 = vmul.f32 %v2099, %v2222
          %v2356 = vmul.f32 %v2100, %v2232
          %v2357 = vmul.f32 %v2101, %v2242
          %v2358 = vmul.f32 %v2102, %v2252
          %v2359 = vmul.f32 %v2103, %v2262
          %v2360 = vmul.f32 %v2104, %v2272
          %v2361 = vmul.f32 %v2105, %v2282
          %v2362 = vmul.f32 %v2106, %v2292
          %v2363 = vmul.f32 %v2107, %v2302
          %v2364 = vmul.f32 %v2108, %v2312
          %v2365 = vmul.f32 %v2109, %v2322
          %v2366 = vmul.f32 %v2110, %v2332
          %v2367 = vmul.f32 %v2111, %v2342
          %v2368 = vmul.f32 %v2112, %v2352
          %v2369 = vld [vmem:[%s5] sm:$0x1]
          %v2371 = vperm.slane %v2369, 0
          %v2373 = vmul.f32 %v2353, %v2371
          %v2374 = vmul.f32 %v2354, %v2371
          %v2375 = vmul.f32 %v2355, %v2371
          %v2376 = vmul.f32 %v2356, %v2371
          %v2377 = vmul.f32 %v2357, %v2371
          %v2378 = vmul.f32 %v2358, %v2371
          %v2379 = vmul.f32 %v2359, %v2371
          %v2380 = vmul.f32 %v2360, %v2371
          %v2381 = vmul.f32 %v2361, %v2371
          %v2382 = vmul.f32 %v2362, %v2371
          %v2383 = vmul.f32 %v2363, %v2371
          %v2384 = vmul.f32 %v2364, %v2371
          %v2385 = vmul.f32 %v2365, %v2371
          %v2386 = vmul.f32 %v2366, %v2371
          %v2387 = vmul.f32 %v2367, %v2371
          %v2388 = vmul.f32 %v2368, %v2371
          %v2389 = vld [vmem:[%s6] sm:$0x1]
          %v2391 = vperm.slane %v2389, 0
          %v2393 = vadd.f32 %v2373, %v2391
          %v2394 = vadd.f32 %v2374, %v2391
          %v2395 = vadd.f32 %v2375, %v2391
          %v2396 = vadd.f32 %v2376, %v2391
          %v2397 = vadd.f32 %v2377, %v2391
          %v2398 = vadd.f32 %v2378, %v2391
          %v2399 = vadd.f32 %v2379, %v2391
          %v2400 = vadd.f32 %v2380, %v2391
          %v2401 = vadd.f32 %v2381, %v2391
          %v2402 = vadd.f32 %v2382, %v2391
          %v2403 = vadd.f32 %v2383, %v2391
          %v2404 = vadd.f32 %v2384, %v2391
          %v2405 = vadd.f32 %v2385, %v2391
          %v2406 = vadd.f32 %v2386, %v2391
          %v2407 = vadd.f32 %v2387, %v2391
          %v2408 = vadd.f32 %v2388, %v2391
          %2409 = vst [vmem:[%s425] sm:$0xff] %v2393
          %2410 = vst [vmem:[%s425 + $0x8] sm:$0xff] %v2394
          %2411 = vst [vmem:[%s425 + $0x10] sm:$0xff] %v2395
          %2412 = vst [vmem:[%s425 + $0x18] sm:$0xff] %v2396
          %2413 = vst [vmem:[%s425 + $0x20] sm:$0xff] %v2397
          %2414 = vst [vmem:[%s425 + $0x28] sm:$0xff] %v2398
          %2415 = vst [vmem:[%s425 + $0x30] sm:$0xff] %v2399
          %2416 = vst [vmem:[%s425 + $0x38] sm:$0xff] %v2400
          %2417 = vst [vmem:[%s425 + $0x40] sm:$0xff] %v2401
          %2418 = vst [vmem:[%s425 + $0x48] sm:$0xff] %v2402
          %2419 = vst [vmem:[%s425 + $0x50] sm:$0xff] %v2403
          %2420 = vst [vmem:[%s425 + $0x58] sm:$0xff] %v2404
          %2421 = vst [vmem:[%s425 + $0x60] sm:$0xff] %v2405
          %2422 = vst [vmem:[%s425 + $0x68] sm:$0xff] %v2406
          %2423 = vst [vmem:[%s425 + $0x70] sm:$0xff] %v2407
          %2424 = vst [vmem:[%s425 + $0x78] sm:$0xff] %v2408
        $region72: #{tpu_custom_call.1} parent=47 // pred_fallthru
          _
        %s2425 = sand.u32 %s223, 1
        %s2426 = scalar_lea.sflag [#allocation7], %s2425
        %s2427 = sand.u32 %s223, 1
        %s2428 = smul.addr %s2427, 128
        %s2429 = scalar_lea.vmem [#allocation13], %s2428
        // Predicated region
        $region73: #{tpu_custom_call.1} parent=47 // pred_check
          %p2430 = pneg %p233
        $region74: #{tpu_custom_call.1} parent=47 // pred_check_branch
          %2432 = sbr.rel (%p2430) target = $region76
        $region75: #{tpu_custom_call.1} parent=47 // pred_region
          %s2433 = smul.u32 16, %s35
          %2435 = vsyncadd %s2426, 0
          %s2436 = smul.addr %s2433, 8
          %s2437 = scalar_lea.hbm %s7, %s2436
          %s2438 = sshll.u32 %s2429, 4
          %s2439 = int_to_ptr.vmem [resolvable:$true] %s2438
          %s2440 = sshll.u32 %s2437, 4
          %s2441 = int_to_ptr.hbm [resolvable:$true] %s2440
          %2446 = dma.vmem_to_hbm [thread:$0]  %s2439, 2048, %s2441, %s2426, 128, 128, 8
        $region76: #{tpu_custom_call.1} parent=47 // pred_fallthru
          _
      $region48: #{tpu_custom_call.1} parent=5 // pred_fallthru
        _
      %p2447 = scmp.le.s32.totalorder 2, %s25
      // Predicated region
      $region77: #{tpu_custom_call.1} parent=5 // pred_check
        %p2448 = pneg %p2447
      $region78: #{tpu_custom_call.1} parent=5 // pred_check_branch
        %2450 = sbr.rel (%p2448) target = $region80
      $region79: #{tpu_custom_call.1} parent=5 // pred_region
        %s2451 = ssub.s32 %s25, 2
        // Predicated region
        $region81: #{tpu_custom_call.1} parent=79 // pred_check
          %p2452 = pneg %p239
        $region82: #{tpu_custom_call.1} parent=79 // pred_check_branch
          %2454 = sbr.rel (%p2452) target = $region84
        $region83: #{tpu_custom_call.1} parent=79 // pred_region
          %s2455 = sand.u32 %s224, 1
          %s2456 = scalar_lea.sflag [#allocation7], %s2455
          %s2457 = sand.u32 %s224, 1
          %s2458 = smul.addr %s2457, 128
          %s2459 = scalar_lea.vmem [#allocation13], %s2458
          %2461 = dma.done %s2456, 2048
        $region84: #{tpu_custom_call.1} parent=79 // pred_fallthru
          _
      $region80: #{tpu_custom_call.1} parent=5 // pred_fallthru
        _
    $region6: #{tpu_custom_call.1} parent=1 // loop_footer
      %s29 = sadd.s32 1, %s25
    $region7: #{tpu_custom_call.1} parent=1 // loop_footer_branch
      %24 = sbr.rel target = $region3
    $region8: #{tpu_custom_call.1} parent=1 // loop_exit
      _
    %2462 = vsyncpa [#allocation6], 1
    %s2463 = scalar_lea.sflag [#allocation6], 1
    %2464 = vsyncpa %s2463, 1
    %2465 = vsyncpa [#allocation9], 1
    %s2466 = scalar_lea.sflag [#allocation9], 1
    %2467 = vsyncpa %s2466, 1
    %2468 = vsyncpa [#allocation12], 1
    %s2469 = scalar_lea.sflag [#allocation12], 1
    %2470 = vsyncpa %s2469, 1
    %2471 = vsyncpa [#allocation7], 1
    %s2472 = scalar_lea.sflag [#allocation7], 1
    %2473 = vsyncpa %s2472, 1

</llo_original>
